<compile_context>
chip_gen: v7x
topology: tpu7x:2x2x1
jax: 0.10.0
libtpu: 0.0.40
codegen_flags: <defaults>
</compile_context>

<pallas_src>
import math
import functools

import jax
import jax.numpy as jnp
from jax.experimental import pallas as pl
from jax.experimental.pallas import tpu as pltpu


# ---------------------------------------------------------------------------
# Pallas kernels
# ---------------------------------------------------------------------------
def _gn_relu_linear_kernel(x_ref, scale_ref, shift_ref, w_ref,
                           out_ref, sum_ref, ssq_ref, *, nrows, tile_v):
    """GroupNorm(folded scale/shift) -> ReLU -> Linear for one vertex tile.

    Pad rows (row >= nrows) are forced to zero so (a) the emitted sum / sumsq
    statistics only cover real vertices and (b) the zero row used for missing
    simplex vertices stays exactly zero.
    """
    x = x_ref[...]                                               # [TV, Cin]
    h = jnp.maximum(x * scale_ref[...] + shift_ref[...], 0.0)
    out = jnp.dot(h, w_ref[...], preferred_element_type=jnp.float32)
    rows = (pl.program_id(0) * tile_v
            + jax.lax.broadcasted_iota(jnp.int32, (tile_v, 1), 0))
    out = jnp.where(rows < nrows, out, 0.0)                      # mask pad rows
    out_ref[...] = out.astype(out_ref.dtype)
    sum_ref[...] = jnp.sum(out, axis=0, keepdims=True).reshape(1, 1, -1)
    ssq_ref[...] = jnp.sum(out * out, axis=0, keepdims=True).reshape(1, 1, -1)


def _gn_relu_linear_cls_kernel(x_ref, scale_ref, shift_ref, w_ref, wc_ref,
                               out_ref, cls_ref, sum_ref, ssq_ref,
                               *, nrows, tile_v):
    """Same as above, plus the fused per-vertex classify projection x @ Wc^T."""
    x = x_ref[...]                                               # [TV, Cin]
    rows = (pl.program_id(0) * tile_v
            + jax.lax.broadcasted_iota(jnp.int32, (tile_v, 1), 0))
    mask = rows < nrows
    cls = jnp.dot(x, wc_ref[...], preferred_element_type=jnp.float32)
    cls_ref[...] = jnp.where(mask, cls, 0.0).astype(cls_ref.dtype)
    h = jnp.maximum(x * scale_ref[...] + shift_ref[...], 0.0)
    out = jnp.dot(h, w_ref[...], preferred_element_type=jnp.float32)
    out = jnp.where(mask, out, 0.0)
    out_ref[...] = out.astype(out_ref.dtype)
    sum_ref[...] = jnp.sum(out, axis=0, keepdims=True).reshape(1, 1, -1)
    ssq_ref[...] = jnp.sum(out * out, axis=0, keepdims=True).reshape(1, 1, -1)


def _slice_deform_classify_kernel(glv_ref, gcls_ref, wts_ref, wdv_ref, gwv_ref,
                                  opw_ref, gww_ref, c0_ref, bc_ref, out_ref,
                                  *, no_deform):
    """Deform-weight computation + slice + classify for one position tile.

    Lane-dense layout (positions on the 128-lane axis):
      glv_ref : [bdim, S, TP]  gathered bottleneck rows (zero if vertex missing)
      gcls_ref: [nc,   S, TP]  gathered pre-classified rows  (lv @ Wc^T)
      wts_ref : [S, TP]        barycentric weights (zero if vertex missing)
      out_ref : [nc, TP]       class logits (transposed)
    """
    wts = wts_ref[...]                                           # [S, TP]
    gcls = gcls_ref[...]                                         # [nc, S, TP]
    if no_deform:                                                # 'slice_no_deform'
        a = wts
    else:
        glv = glv_ref[...]                                       # [bdim, S, TP]
        wdv = wdv_ref[...][:, :, None]                           # [bdim, 1, 1]
        gwv = gwv_ref[...]                                       # [bdim, 1]
        dot = jnp.sum(glv * wdv, axis=0)                         # [S, TP]
        m_lv = jnp.max(glv, axis=1)                              # [bdim, TP]
        m_w = jnp.max(wts, axis=0, keepdims=True)                # [1, TP]
        corr = jnp.sum(m_lv * gwv, axis=0, keepdims=True)        # [1, TP]
        # a_j = w_j + (f_j . wd - (gamma*m + beta).wd + bd)
        a = (opw_ref[...] * wts + dot - corr
             - gww_ref[...] * m_w + c0_ref[...])                 # [S, TP]
    # missing vertices have all-zero gcls rows, so they contribute nothing.
    acc = jnp.sum(a[None, :, :] * gcls, axis=1)                  # [nc, TP]
    out_ref[...] = (acc + bc_ref[...]).astype(out_ref.dtype)


# ---------------------------------------------------------------------------
# Wrapper helpers
# ---------------------------------------------------------------------------
def _round_up(a, m):
    return ((a + m - 1) // m) * m


def _pick_tile(n, max_tile, align):
    """Largest tile <= max_tile (aligned) that still gives a grid of >= 2 steps
    when possible, so v7x can shard the 'parallel' axis over both TensorCores."""
    half = _round_up(max(1, (n + 1) // 2), align)
    return max(align, min(max_tile, half))


def _group_norm_scale_shift(x, gn_weight, gn_bias, eps=1e-5):
    """Fold torch.nn.GroupNorm statistics of x into per-channel scale/shift."""
    v, c = x.shape
    g = 32 if c % 32 == 0 else c // 2
    cg = c // g
    xg = x.reshape(v, g, cg)
    mean = jnp.mean(xg, axis=(0, 2))                  # [g]
    var = jnp.var(xg, axis=(0, 2))                    # [g] (biased, like torch)
    inv = jax.lax.rsqrt(var + eps)
    inv_c = jnp.repeat(inv, cg)
    mean_c = jnp.repeat(mean, cg)
    scale = gn_weight * inv_c
    shift = gn_bias - mean_c * scale
    return scale.reshape(1, c), shift.reshape(1, c)


def _scale_shift_from_stats(sum_c, ssq_c, count, gn_weight, gn_bias, eps=1e-5):
    """GroupNorm scale/shift from per-channel sum / sum-of-squares (pad-free)."""
    c = sum_c.shape[0]
    g = 32 if c % 32 == 0 else c // 2
    cg = c // g
    gs = jnp.sum(sum_c.reshape(g, cg), axis=1)
    gq = jnp.sum(ssq_c.reshape(g, cg), axis=1)
    n = float(count * cg)
    mean = gs / n
    var = gq / n - mean * mean                        # biased variance
    inv = jax.lax.rsqrt(var + eps)
    scale = gn_weight * jnp.repeat(inv, cg)
    shift = gn_bias - jnp.repeat(mean * inv, cg) * gn_weight
    return scale.reshape(1, c), shift.reshape(1, c)


def gn_relu_linear(x_padded, nrows, scale, shift, w_t, *, tile_v, wc_t=None):
    """One GnRelu1x1 layer, tiled over (padded) vertices.

    Returns (out, sum_c, ssq_c) or (out, cls, sum_c, ssq_c) with sum_c / ssq_c
    being per-channel sum and sum-of-squares of `out` over the real rows.
    """
    vp, cin = x_padded.shape
    cout = w_t.shape[1]
    nt = vp // tile_v
    cparams = pltpu.CompilerParams(dimension_semantics=("parallel",))

    stat_spec = pl.BlockSpec((1, 1, cout), lambda i: (i, 0, 0))
    stat_shape = jax.ShapeDtypeStruct((nt, 1, cout), jnp.float32)

    if wc_t is None:
        kern = functools.partial(_gn_relu_linear_kernel,
                                 nrows=nrows, tile_v=tile_v)
        out, ssum, ssq = pl.pallas_call(
            kern,
            out_shape=(jax.ShapeDtypeStruct((vp, cout), jnp.float32),
                       stat_shape, stat_shape),
            grid_spec=pltpu.PrefetchScalarGridSpec(
                num_scalar_prefetch=0, grid=(nt,),
                in_specs=[
                    pl.BlockSpec((tile_v, cin), lambda i: (i, 0)),
                    pl.BlockSpec((1, cin), lambda i: (0, 0)),
                    pl.BlockSpec((1, cin), lambda i: (0, 0)),
                    pl.BlockSpec((cin, cout), lambda i: (0, 0)),
                ],
                out_specs=(pl.BlockSpec((tile_v, cout), lambda i: (i, 0)),
                           stat_spec, stat_spec),
            ),
            compiler_params=cparams,
        )(x_padded, scale, shift, w_t)
        return out, jnp.sum(ssum, axis=(0, 1)), jnp.sum(ssq, axis=(0, 1))

    nc = wc_t.shape[1]
    kern = functools.partial(_gn_relu_linear_cls_kernel,
                             nrows=nrows, tile_v=tile_v)
    out, cls, ssum, ssq = pl.pallas_call(
        kern,
        out_shape=(jax.ShapeDtypeStruct((vp, cout), jnp.float32),
                   jax.ShapeDtypeStruct((vp, nc), jnp.float32),
                   stat_shape, stat_shape),
        grid_spec=pltpu.PrefetchScalarGridSpec(
            num_scalar_prefetch=0, grid=(nt,),
            in_specs=[
                pl.BlockSpec((tile_v, cin), lambda i: (i, 0)),
                pl.BlockSpec((1, cin), lambda i: (0, 0)),
                pl.BlockSpec((1, cin), lambda i: (0, 0)),
                pl.BlockSpec((cin, cout), lambda i: (0, 0)),
                pl.BlockSpec((cin, nc), lambda i: (0, 0)),
            ],
            out_specs=(pl.BlockSpec((tile_v, cout), lambda i: (i, 0)),
                       pl.BlockSpec((tile_v, nc), lambda i: (i, 0)),
                       stat_spec, stat_spec),
        ),
        compiler_params=cparams,
    )(x_padded, scale, shift, w_t, wc_t)
    return out, cls, jnp.sum(ssum, axis=(0, 1)), jnp.sum(ssq, axis=(0, 1))


def slice_fast_forward(lv, positions, splatting_indices, splatting_weights,
                       params, *, nr_classes, experiment="",
                       tile_v=512, tile_p=2048):
    """Full SliceFastCUDALatticeModule forward (dropout_prob == 0)."""
    nr_positions, pos_dim = positions.shape
    s = pos_dim + 1
    v, val_dim = lv.shape
    nc = nr_classes

    # ---- vertex-side tiling: guarantee at least one zero pad row (index V),
    #      used as the gather target for missing simplex vertices.
    tile_v = _pick_tile(v + 1, tile_v, 8)
    vp = _round_up(v + 1, tile_v)
    lv_p = jnp.pad(lv, ((0, vp - v), (0, 0)))

    # ---- stepdown x2 + bottleneck; classify pre-projection fused into layer 0;
    #      GroupNorm stats for the *next* layer come out of each kernel.
    # TODO(synk): DropoutLattice (train-mode Dropout2d on lv) not implemented;
    #             dropout_prob == 0 path only (eval semantics).
    scale0, shift0 = _group_norm_scale_shift(lv, params["gn0_w"], params["gn0_b"])
    h0, cls_table, s0, q0 = gn_relu_linear(lv_p, v, scale0, shift0,
                                           params["w0_t"], tile_v=tile_v,
                                           wc_t=params["wc_t"])
    scale1, shift1 = _scale_shift_from_stats(s0, q0, v,
                                             params["gn1_w"], params["gn1_b"])
    h1, s1, q1 = gn_relu_linear(h0, v, scale1, shift1,
                                params["w1_t"], tile_v=tile_v)
    scale2, shift2 = _scale_shift_from_stats(s1, q1, v,
                                             params["gn2_w"], params["gn2_b"])
    lvb, _, _ = gn_relu_linear(h1, v, scale2, shift2,
                               params["wb_t"], tile_v=tile_v)      # [Vp, 8]

    bdim = lvb.shape[1]
    fdim = bdim + 1

    # ---- GatherLattice (real row gather, produced directly in the lane-dense
    #      layouts the slice kernel wants; padded position rows gather zeros).
    # TODO(synk): no reliable Mosaic lowering for arbitrary-V row gather inside
    # a kernel; done with XLA's jnp.take on the narrow transposed tables.
    tile_p = _pick_tile(nr_positions, tile_p, 128)
    pp = _round_up(nr_positions, tile_p)
    idx = splatting_indices.reshape(nr_positions, s).astype(jnp.int32)
    wsp = splatting_weights.reshape(nr_positions, s).astype(jnp.float32)
    idx = jnp.pad(idx, ((0, pp - nr_positions), (0, 0)), constant_values=-1)
    wsp = jnp.pad(wsp, ((0, pp - nr_positions), (0, 0)))
    valid = idx >= 0
    safe_idx = jnp.where(valid, idx, v)                  # -1 -> zero row (index V)
    w_eff = jnp.where(valid, wsp, 0.0)

    idx_t = safe_idx.T                                   # [S, PP]
    wts_t = w_eff.T                                      # [S, PP]
    lvb_t = lvb.T                                        # [bdim, Vp]
    cls_t = cls_table.T                                  # [nc, Vp]
    glv = jnp.take(lvb_t, idx_t, axis=1)                 # [bdim, S, PP]
    gcls = jnp.take(cls_t, idx_t, axis=1)                # [nc, S, PP]

    # ---- fold the deform-weight parameters
    wd = params["wd"].astype(jnp.float32)                # [fdim]
    gamma = params["gamma"].astype(jnp.float32)
    beta = params["beta"].astype(jnp.float32)
    wd_lv = wd[:bdim].reshape(bdim, 1)
    gw_lv = (gamma[:bdim] * wd[:bdim]).reshape(bdim, 1)
    opw = (1.0 + wd[bdim]).reshape(1, 1)                 # multiplies w_j
    gww = (gamma[bdim] * wd[bdim]).reshape(1, 1)         # multiplies max_j w_j
    c0 = (params["bd"][0] - jnp.sum(beta * wd)).reshape(1, 1)
    bc_col = params["bc"].reshape(nc, 1).astype(jnp.float32)

    # ---- deform weights + slice + classify, lane-dense, tiled over positions
    kernel = functools.partial(
        _slice_deform_classify_kernel,
        no_deform=(experiment == "slice_no_deform"))
    logits_t = pl.pallas_call(
        kernel,
        out_shape=jax.ShapeDtypeStruct((nc, pp), jnp.float32),
        grid_spec=pltpu.PrefetchScalarGridSpec(
            num_scalar_prefetch=0, grid=(pp // tile_p,),
            in_specs=[
                pl.BlockSpec((bdim, s, tile_p), lambda i: (0, 0, i)),
                pl.BlockSpec((nc, s, tile_p), lambda i: (0, 0, i)),
                pl.BlockSpec((s, tile_p), lambda i: (0, i)),
                pl.BlockSpec((bdim, 1), lambda i: (0, 0)),
                pl.BlockSpec((bdim, 1), lambda i: (0, 0)),
                pl.BlockSpec((1, 1), lambda i: (0, 0)),
                pl.BlockSpec((1, 1), lambda i: (0, 0)),
                pl.BlockSpec((1, 1), lambda i: (0, 0)),
                pl.BlockSpec((nc, 1), lambda i: (0, 0)),
            ],
            out_specs=pl.BlockSpec((nc, tile_p), lambda i: (0, i)),
        ),
        compiler_params=pltpu.CompilerParams(
            dimension_semantics=("parallel",)),
    )(glv, gcls, wts_t, wd_lv, gw_lv, opw, gww, c0, bc_col)

    # TODO(synk): lattice_structure bookkeeping (ls.set_values) has no compute.
    return logits_t[:, :nr_positions].T                  # [P, nc]


# ---------------------------------------------------------------------------
# Pure-JAX reference (mirrors the PyTorch forward directly)
# ---------------------------------------------------------------------------
def _reference_forward(lv, positions, splatting_indices, splatting_weights,
                       params, *, nr_classes, experiment=""):
    eps = 1e-5

    def gn_relu_linear_ref(x, gw, gb, w_t):
        v, c = x.shape
        g = 32 if c % 32 == 0 else c // 2
        xg = x.reshape(v, g, c // g)
        mean = jnp.mean(xg, axis=(0, 2), keepdims=True)
        var = jnp.var(xg, axis=(0, 2), keepdims=True)
        xn = ((xg - mean) / jnp.sqrt(var + eps)).reshape(v, c)
        xn = xn * gw[None, :] + gb[None, :]
        return jnp.maximum(xn, 0.0) @ w_t

    h0 = gn_relu_linear_ref(lv, params["gn0_w"], params["gn0_b"], params["w0_t"])
    h1 = gn_relu_linear_ref(h0, params["gn1_w"], params["gn1_b"], params["w1_t"])
    lvb = gn_relu_linear_ref(h1, params["gn2_w"], params["gn2_b"], params["wb_t"])

    p, pos_dim = positions.shape
    s = pos_dim + 1
    idx = splatting_indices.reshape(p, s)
    wsp = splatting_weights.reshape(p, s)
    valid = idx >= 0
    safe_idx = jnp.where(valid, idx, 0)

    gb = jnp.where(valid[..., None], lvb[safe_idx], 0.0)             # [P,S,8]
    w_eff = jnp.where(valid, wsp, 0.0)
    rowified = jnp.concatenate([gb, w_eff[..., None]], axis=-1)      # [P,S,9]
    max_vals = jnp.max(rowified, axis=1, keepdims=True)
    f = rowified - (params["gamma"][None, None, :] * max_vals
                    + params["beta"][None, None, :])
    delta = jnp.einsum("psf,f->ps", f, params["wd"]) + params["bd"]
    if experiment == "slice_no_deform":
        delta = delta * 0.0
    a = jnp.where(valid, wsp + delta, 0.0)
    lv_g = jnp.where(valid[..., None], lv[safe_idx], 0.0)            # [P,S,val_dim]
    sliced = jnp.einsum("ps,psd->pd", a, lv_g)
    return sliced @ params["wc_t"] + params["bc"][None, :]


# ---------------------------------------------------------------------------
if __name__ == "__main__":
    key = jax.random.PRNGKey(0)

    pos_dim = 3
    s = pos_dim + 1
    nr_vertices = 500
    nr_positions = 2000
    val_dim = 32
    nr_classes = 5
    bottleneck = 8

    keys = jax.random.split(key, 12)
    lv = jax.random.normal(keys[0], (nr_vertices, val_dim), dtype=jnp.float32)
    positions = jax.random.normal(keys[1], (nr_positions, pos_dim),
                                  dtype=jnp.float32)

    # splatting indices / weights: one simplex (pos_dim+1 vertices) per position,
    # ~10% of the vertices marked missing (-1); barycentric-ish weights.
    idx = jax.random.randint(keys[2], (nr_positions, s), 0, nr_vertices,
                             dtype=jnp.int32)
    missing = jax.random.uniform(keys[3], (nr_positions, s)) < 0.1
    splatting_indices = jnp.where(missing, jnp.int32(-1), idx).reshape(-1)
    wraw = jax.random.uniform(keys[4], (nr_positions, s), minval=0.05, maxval=1.0)
    splatting_weights = (wraw / jnp.sum(wraw, axis=1, keepdims=True)
                         ).reshape(-1).astype(jnp.float32)

    # Parameter init mirroring the lazily-constructed torch layers.
    def kaiming_normal(k, out_in):
        std = math.sqrt(2.0) / math.sqrt(out_in[1])
        return std * jax.random.normal(k, out_in, dtype=jnp.float32)

    w0 = kaiming_normal(keys[5], (val_dim, val_dim))           # stepdown0: 32 -> 32
    w1 = kaiming_normal(keys[6], (val_dim // 2, val_dim))      # stepdown1: 32 -> 16
    wb = kaiming_normal(keys[7], (bottleneck, val_dim // 2))   # bottleneck: 16 -> 8

    fdim = bottleneck + 1                                      # 9
    gain_tanh = 5.0 / 3.0
    bound = math.sqrt(3.0) * gain_tanh / math.sqrt(fdim)
    wd = 0.1 * jax.random.uniform(keys[8], (fdim,), minval=-bound, maxval=bound,
                                  dtype=jnp.float32)
    bd = jnp.zeros((1,), jnp.float32)
    gamma = jnp.ones((fdim,), jnp.float32)
    beta = jnp.zeros((fdim,), jnp.float32)

    cbound = 1.0 / math.sqrt(val_dim)
    wc = jax.random.uniform(keys[9], (nr_classes, val_dim), minval=-cbound,
                            maxval=cbound, dtype=jnp.float32)
    bc = jax.random.uniform(keys[10], (nr_classes,), minval=-cbound,
                            maxval=cbound, dtype=jnp.float32)

    params = dict(
        gn0_w=jnp.ones((val_dim,), jnp.float32),
        gn0_b=jnp.zeros((val_dim,), jnp.float32),
        w0_t=w0.T,
        gn1_w=jnp.ones((val_dim,), jnp.float32),
        gn1_b=jnp.zeros((val_dim,), jnp.float32),
        w1_t=w1.T,
        gn2_w=jnp.ones((val_dim // 2,), jnp.float32),
        gn2_b=jnp.zeros((val_dim // 2,), jnp.float32),
        wb_t=wb.T,
        gamma=gamma, beta=beta, wd=wd, bd=bd,
        wc_t=wc.T, bc=bc,
    )

    logits = slice_fast_forward(lv, positions, splatting_indices,
                                splatting_weights, params,
                                nr_classes=nr_classes, experiment="",
                                tile_v=512, tile_p=2048)
    logits = jax.block_until_ready(logits)

    ref = _reference_forward(lv, positions, splatting_indices,
                             splatting_weights, params,
                             nr_classes=nr_classes, experiment="")
    assert logits.shape == (nr_positions, nr_classes)
    assert jnp.allclose(logits, ref, atol=1e-3, rtol=1e-3), "mismatch vs reference"

    print("KERNEL_OK")
</pallas_src>

<mosaic_0001>
module attributes {stable_mosaic.version = 11 : i64} {
  func.func @_gn_relu_linear_cls_kernel(%arg0: i32, %arg1: memref<256x32xf32, #tpu.memory_space<vmem>>, %arg2: memref<1x32xf32, #tpu.memory_space<vmem>>, %arg3: memref<1x32xf32, #tpu.memory_space<vmem>>, %arg4: memref<32x32xf32, #tpu.memory_space<vmem>>, %arg5: memref<32x5xf32, #tpu.memory_space<vmem>>, %arg6: memref<256x32xf32, #tpu.memory_space<vmem>>, %arg7: memref<256x5xf32, #tpu.memory_space<vmem>>, %arg8: memref<1x1x32xf32, #tpu.memory_space<vmem>>, %arg9: memref<1x1x32xf32, #tpu.memory_space<vmem>>) attributes {dimension_semantics = [#tpu.dimension_semantics<parallel>], iteration_bounds = array<i64: 2>, scalar_prefetch = 0 : i64, scratch_operands = 0 : i64, tpu.core_type = #tpu.core_type<tc>, window_params = [{transform_indices = @transform_0, window_bounds = array<i64: 256, 32>}, {pipeline_mode = #tpu.pipeline_mode<synchronous>, transform_indices = @transform_1, window_bounds = array<i64: 1, 32>}, {pipeline_mode = #tpu.pipeline_mode<synchronous>, transform_indices = @transform_2, window_bounds = array<i64: 1, 32>}, {pipeline_mode = #tpu.pipeline_mode<synchronous>, transform_indices = @transform_3, window_bounds = array<i64: 32, 32>}, {pipeline_mode = #tpu.pipeline_mode<synchronous>, transform_indices = @transform_4, window_bounds = array<i64: 32, 5>}, {transform_indices = @transform_5, window_bounds = array<i64: 256, 32>}, {transform_indices = @transform_6, window_bounds = array<i64: 256, 5>}, {transform_indices = @transform_7, window_bounds = array<i64: 1, 1, 32>}, {transform_indices = @transform_8, window_bounds = array<i64: 1, 1, 32>}]} {
    %c0 = arith.constant 0 : index
    %c0_0 = arith.constant 0 : index
    %0 = vector.load %arg1[%c0, %c0_0] : memref<256x32xf32, #tpu.memory_space<vmem>>, vector<256x32xf32>
    %c256_i32 = arith.constant 256 : i32
    %1 = arith.muli %arg0, %c256_i32 : i32
    %2 = tpu.iota {dimensions = array<i32: 0>} : vector<256x1xi32>
    %3 = vector.broadcast %1 : i32 to vector<256x1xi32>
    %4 = arith.addi %3, %2 : vector<256x1xi32>
    %c500_i32 = arith.constant 500 : i32
    %5 = vector.broadcast %c500_i32 : i32 to vector<256x1xi32>
    %6 = arith.cmpi slt, %4, %5 : vector<256x1xi32>
    %c0_1 = arith.constant 0 : index
    %c0_2 = arith.constant 0 : index
    %7 = vector.load %arg5[%c0_1, %c0_2] : memref<32x5xf32, #tpu.memory_space<vmem>>, vector<32x5xf32>
    %cst = arith.constant dense<0.000000e+00> : vector<256x5xf32>
    %8 = tpu.matmul %0, %7, %cst {dimension_numbers = #tpu.dot_dimension_numbers<[1], [0], [0], [1], [0, 0, 1, 1], [], []>} : vector<256x32xf32>, vector<32x5xf32>, vector<256x5xf32> -> vector<256x5xf32>
    %cst_3 = arith.constant 0.000000e+00 : f32
    %9 = vector.shape_cast %6 : vector<256x1xi1> to vector<256x1xi1>
    %10 = vector.broadcast %9 : vector<256x1xi1> to vector<256x5xi1>
    %11 = vector.broadcast %cst_3 : f32 to vector<256x5xf32>
    %12 = arith.select %10, %8, %11 : vector<256x5xi1>, vector<256x5xf32>
    %c0_4 = arith.constant 0 : index
    %c0_5 = arith.constant 0 : index
    %13 = vector.load %arg7[%c0_4, %c0_5] : memref<256x5xf32, #tpu.memory_space<vmem>>, vector<256x5xf32>
    tpu.vector_store %arg7[%c0_4, %c0_5], %12 {strides = array<i32>} : memref<256x5xf32, #tpu.memory_space<vmem>>, vector<256x5xf32>,
    %c0_6 = arith.constant 0 : index
    %c0_7 = arith.constant 0 : index
    %14 = vector.load %arg2[%c0_6, %c0_7] : memref<1x32xf32, #tpu.memory_space<vmem>>, vector<1x32xf32>
    %15 = vector.broadcast %14 : vector<1x32xf32> to vector<256x32xf32>
    %16 = arith.mulf %0, %15 : vector<256x32xf32>
    %c0_8 = arith.constant 0 : index
    %c0_9 = arith.constant 0 : index
    %17 = vector.load %arg3[%c0_8, %c0_9] : memref<1x32xf32, #tpu.memory_space<vmem>>, vector<1x32xf32>
    %18 = vector.broadcast %17 : vector<1x32xf32> to vector<256x32xf32>
    %19 = arith.addf %16, %18 : vector<256x32xf32>
    %cst_10 = arith.constant 0.000000e+00 : f32
    %20 = vector.broadcast %cst_10 : f32 to vector<256x32xf32>
    %21 = arith.maximumf %19, %20 : vector<256x32xf32>
    %c0_11 = arith.constant 0 : index
    %c0_12 = arith.constant 0 : index
    %22 = vector.load %arg4[%c0_11, %c0_12] : memref<32x32xf32, #tpu.memory_space<vmem>>, vector<32x32xf32>
    %cst_13 = arith.constant dense<0.000000e+00> : vector<256x32xf32>
    %23 = tpu.matmul %21, %22, %cst_13 {dimension_numbers = #tpu.dot_dimension_numbers<[1], [0], [0], [1], [0, 0, 1, 1], [], []>} : vector<256x32xf32>, vector<32x32xf32>, vector<256x32xf32> -> vector<256x32xf32>
    %cst_14 = arith.constant 0.000000e+00 : f32
    %24 = vector.shape_cast %6 : vector<256x1xi1> to vector<256x1xi1>
    %25 = vector.broadcast %24 : vector<256x1xi1> to vector<256x32xi1>
    %26 = vector.broadcast %cst_14 : f32 to vector<256x32xf32>
    %27 = arith.select %25, %23, %26 : vector<256x32xi1>, vector<256x32xf32>
    %c0_15 = arith.constant 0 : index
    %c0_16 = arith.constant 0 : index
    %28 = vector.load %arg6[%c0_15, %c0_16] : memref<256x32xf32, #tpu.memory_space<vmem>>, vector<256x32xf32>
    tpu.vector_store %arg6[%c0_15, %c0_16], %27 {strides = array<i32>} : memref<256x32xf32, #tpu.memory_space<vmem>>, vector<256x32xf32>,
    %cst_17 = arith.constant dense<0.000000e+00> : vector<32xf32>
    %29 = vector.multi_reduction <add>, %27, %cst_17 [0] : vector<256x32xf32> to vector<32xf32>
    %30 = vector.shape_cast %29 : vector<32xf32> to vector<1x32xf32>
    %31 = vector.shape_cast %30 : vector<1x32xf32> to vector<1x1x32xf32>
    %c0_18 = arith.constant 0 : index
    %c0_19 = arith.constant 0 : index
    %c0_20 = arith.constant 0 : index
    %32 = vector.load %arg8[%c0_18, %c0_19, %c0_20] : memref<1x1x32xf32, #tpu.memory_space<vmem>>, vector<1x1x32xf32>
    tpu.vector_store %arg8[%c0_18, %c0_19, %c0_20], %31 {strides = array<i32>} : memref<1x1x32xf32, #tpu.memory_space<vmem>>, vector<1x1x32xf32>,
    %33 = arith.mulf %27, %27 : vector<256x32xf32>
    %cst_21 = arith.constant dense<0.000000e+00> : vector<32xf32>
    %34 = vector.multi_reduction <add>, %33, %cst_21 [0] : vector<256x32xf32> to vector<32xf32>
    %35 = vector.shape_cast %34 : vector<32xf32> to vector<1x32xf32>
    %36 = vector.shape_cast %35 : vector<1x32xf32> to vector<1x1x32xf32>
    %c0_22 = arith.constant 0 : index
    %c0_23 = arith.constant 0 : index
    %c0_24 = arith.constant 0 : index
    %37 = vector.load %arg9[%c0_22, %c0_23, %c0_24] : memref<1x1x32xf32, #tpu.memory_space<vmem>>, vector<1x1x32xf32>
    tpu.vector_store %arg9[%c0_22, %c0_23, %c0_24], %36 {strides = array<i32>} : memref<1x1x32xf32, #tpu.memory_space<vmem>>, vector<1x1x32xf32>,
    return
  }
  func.func @transform_0(%arg0: i32) -> (i32, i32) {
    %c0_i32 = arith.constant 0 : i32
    %c0_i32_0 = arith.constant 0 : i32
    return %arg0, %c0_i32 : i32, i32
  }
  func.func @transform_1(%arg0: i32) -> (i32, i32) {
    %c0_i32 = arith.constant 0 : i32
    %c0_i32_0 = arith.constant 0 : i32
    %c0_i32_1 = arith.constant 0 : i32
    return %c0_i32, %c0_i32_0 : i32, i32
  }
  func.func @transform_2(%arg0: i32) -> (i32, i32) {
    %c0_i32 = arith.constant 0 : i32
    %c0_i32_0 = arith.constant 0 : i32
    %c0_i32_1 = arith.constant 0 : i32
    return %c0_i32, %c0_i32_0 : i32, i32
  }
  func.func @transform_3(%arg0: i32) -> (i32, i32) {
    %c0_i32 = arith.constant 0 : i32
    %c0_i32_0 = arith.constant 0 : i32
    %c0_i32_1 = arith.constant 0 : i32
    return %c0_i32, %c0_i32_0 : i32, i32
  }
  func.func @transform_4(%arg0: i32) -> (i32, i32) {
    %c0_i32 = arith.constant 0 : i32
    %c0_i32_0 = arith.constant 0 : i32
    %c0_i32_1 = arith.constant 0 : i32
    return %c0_i32, %c0_i32_0 : i32, i32
  }
  func.func @transform_5(%arg0: i32) -> (i32, i32) {
    %c0_i32 = arith.constant 0 : i32
    %c0_i32_0 = arith.constant 0 : i32
    return %arg0, %c0_i32 : i32, i32
  }
  func.func @transform_6(%arg0: i32) -> (i32, i32) {
    %c0_i32 = arith.constant 0 : i32
    %c0_i32_0 = arith.constant 0 : i32
    return %arg0, %c0_i32 : i32, i32
  }
  func.func @transform_7(%arg0: i32) -> (i32, i32, i32) {
    %c0_i32 = arith.constant 0 : i32
    %c0_i32_0 = arith.constant 0 : i32
    %c0_i32_1 = arith.constant 0 : i32
    return %arg0, %c0_i32, %c0_i32_0 : i32, i32, i32
  }
  func.func @transform_8(%arg0: i32) -> (i32, i32, i32) {
    %c0_i32 = arith.constant 0 : i32
    %c0_i32_0 = arith.constant 0 : i32
    %c0_i32_1 = arith.constant 0 : i32
    return %arg0, %c0_i32, %c0_i32_0 : i32, i32, i32
  }
}

</mosaic_0001>

<llo_original>
// kernel: tpu_custom_call.1
$region0: #{tpu_custom_call.1}
  #allocation0 [shape = 'u32[]', space=smem, size = 0x4, offset = 0x4, fixed_abs, tag = 'smem constant byte address 0x4 - core index']
  #allocation1 [shape = 'u32[144,128]{1,0:T(1,128)}', space=vmem, size = 0x12000, scoped, tag = 'internal scratch']
  %s0 = inlined_call_operand.vmem [shape: f32[512,32], index: 0, kind: input, shape index: {}]
  %s1 = inlined_call_operand.vmem [shape: f32[1,32], index: 1, kind: input, shape index: {}]
  %s2 = inlined_call_operand.vmem [shape: f32[1,32], index: 2, kind: input, shape index: {}]
  %s3 = inlined_call_operand.vmem [shape: f32[32,32], index: 3, kind: input, shape index: {}]
  %s4 = inlined_call_operand.vmem [shape: f32[32,5], index: 4, kind: input, shape index: {}]
  %s5 = inlined_call_operand.vmem [shape: f32[512,32], index: 5, kind: output, shape index: {0}]
  %s6 = inlined_call_operand.vmem [shape: f32[512,5], index: 6, kind: output, shape index: {1}]
  %s7 = inlined_call_operand.hbm [shape: f32[2,1,32], index: 7, kind: output, shape index: {2}]
  %s8 = inlined_call_operand.hbm [shape: f32[2,1,32], index: 8, kind: output, shape index: {3}]
  %9 = xla_tuple %s5, %s6, %s7, %s8
  %s10 = sld [smem:[#allocation0]]
  $region77: #{tpu_custom_call.1} parent=0
    _
  %s12 = ssub.s32 1, %s10
  %s13 = scalar_select 0, %s12, %s10
  $region1: #{tpu_custom_call.1} parent=0
    #allocation2 [shape = 'u8[1024]{0}', space=vmem, size = 0x400, scoped, tag = 'output window, operand 2']
    #allocation3 [shape = 's32[2]{0}', space=sflag, size = 0x8, scoped, tag = 'scoped memory for tpu_custom_call.1']
    #allocation4 [shape = 'u8[1024]{0}', space=vmem, size = 0x400, scoped, tag = 'output window, operand 3']
    #allocation5 [shape = 's32[2]{0}', space=sflag, size = 0x8, scoped, tag = 'scoped memory for tpu_custom_call.1']
    %14 = vsyncpa [#allocation3], 0
    %s15 = scalar_lea.sflag [#allocation3], 1
    %16 = vsyncpa %s15, 0
    %17 = vsyncpa [#allocation5], 0
    %s18 = scalar_lea.sflag [#allocation5], 1
    %19 = vsyncpa %s18, 0
    loop: start=0, step=1, limit=4
    $region2: #{tpu_custom_call.1} parent=1 // loop_pre_header
      _
    $region3: #{tpu_custom_call.1} parent=1 // loop_header
      %s21 = sphi 0, %s25
      %p22 = scmp.ge.s32.totalorder %s21, 4
      %s31 = sphi 0, %s33
      %s34 = sphi 0, %s31
      %s35 = sphi 0, %s34
      %s51 = sphi 0, %s35
      %s55 = sphi 0, %s55
      %s57 = sphi 0, %s55
      %s58 = sphi 0, %s57
      %s72 = sphi 0, %s58
      %s76 = sphi 0, %s76
      %s78 = sphi 0, %s76
      %s79 = sphi 0, %s78
      %s93 = sphi 0, %s79
      %s97 = sphi 0, %s97
      %s99 = sphi 0, %s97
      %s100 = sphi 0, %s99
      %s114 = sphi 0, %s100
      %s118 = sphi 0, %s118
      %s120 = sphi 0, %s118
      %s121 = sphi 0, %s120
      %s135 = sphi 0, %s121
      %s141 = sphi 0, %s143
      %s144 = sphi 0, %s141
      %s145 = sphi 0, %s144
      %s161 = sphi 0, %s145
      %s167 = sphi 0, %s169
      %s170 = sphi 0, %s167
      %s171 = sphi 0, %s170
      %s187 = sphi 0, %s171
      %s193 = sphi 0, %s195
      %s196 = sphi 0, %s193
      %s197 = sphi 0, %s196
      %s213 = sphi 0, %s197
      %s219 = sphi 0, %s221
      %s222 = sphi 0, %s219
      %s223 = sphi 0, %s222
      %s239 = sphi 0, %s223
    $region4: #{tpu_custom_call.1} parent=1 // loop_header_branch
      %24 = sbr.rel (%p22) target = $region8
    $region5: #{tpu_custom_call.1} parent=1 // loop_body
      %s26 = ssub.s32 %s21, 1
      %s27 = ssub.s32 %s21, 2
      %s28 = sadd.s32 %s21, 1
      %s29 = ssub.s32 %s21, %s28
      %p30 = scmp.eq.s32.totalorder %s29, 0
      %s32 = sadd.s32 %s31, 1
      %s33 = scalar_select %p30, %s31, %s32
      %p36 = pneg %p30
      %p37 = scmp.eq.s32.totalorder %s21, 1
      %p38 = por %p36, %p37
      %p39 = scmp.ne.s32.totalorder %s31, %s34
      %p40 = scmp.eq.s32.totalorder %s21, 0
      %p41 = por %p39, %p40
      %p42 = scmp.ne.s32.totalorder %s31, %s34
      %p43 = scmp.eq.s32.totalorder %s26, 1
      %p44 = por %p42, %p43
      %p45 = scmp.ne.s32.totalorder %s34, %s35
      %p46 = scmp.eq.s32.totalorder %s26, 0
      %p47 = por %p45, %p46
      %p48 = scmp.ne.s32.totalorder %s34, %s35
      %p49 = scmp.eq.s32.totalorder %s27, 1
      %p50 = por %p48, %p49
      %p52 = scmp.ne.s32.totalorder %s35, %s51
      %p53 = scmp.eq.s32.totalorder %s27, 0
      %p54 = por %p52, %p53
      %s56 = sadd.s32 %s55, 1
      %p59 = scmp.eq.s32.totalorder %s21, 1
      %p60 = scmp.ne.s32.totalorder %s55, %s57
      %p61 = scmp.eq.s32.totalorder %s21, 0
      %p62 = por %p60, %p61
      %p63 = scmp.ne.s32.totalorder %s55, %s57
      %p64 = scmp.eq.s32.totalorder %s26, 1
      %p65 = por %p63, %p64
      %p66 = scmp.ne.s32.totalorder %s57, %s58
      %p67 = scmp.eq.s32.totalorder %s26, 0
      %p68 = por %p66, %p67
      %p69 = scmp.ne.s32.totalorder %s57, %s58
      %p70 = scmp.eq.s32.totalorder %s27, 1
      %p71 = por %p69, %p70
      %p73 = scmp.ne.s32.totalorder %s58, %s72
      %p74 = scmp.eq.s32.totalorder %s27, 0
      %p75 = por %p73, %p74
      %s77 = sadd.s32 %s76, 1
      %p80 = scmp.eq.s32.totalorder %s21, 1
      %p81 = scmp.ne.s32.totalorder %s76, %s78
      %p82 = scmp.eq.s32.totalorder %s21, 0
      %p83 = por %p81, %p82
      %p84 = scmp.ne.s32.totalorder %s76, %s78
      %p85 = scmp.eq.s32.totalorder %s26, 1
      %p86 = por %p84, %p85
      %p87 = scmp.ne.s32.totalorder %s78, %s79
      %p88 = scmp.eq.s32.totalorder %s26, 0
      %p89 = por %p87, %p88
      %p90 = scmp.ne.s32.totalorder %s78, %s79
      %p91 = scmp.eq.s32.totalorder %s27, 1
      %p92 = por %p90, %p91
      %p94 = scmp.ne.s32.totalorder %s79, %s93
      %p95 = scmp.eq.s32.totalorder %s27, 0
      %p96 = por %p94, %p95
      %s98 = sadd.s32 %s97, 1
      %p101 = scmp.eq.s32.totalorder %s21, 1
      %p102 = scmp.ne.s32.totalorder %s97, %s99
      %p103 = scmp.eq.s32.totalorder %s21, 0
      %p104 = por %p102, %p103
      %p105 = scmp.ne.s32.totalorder %s97, %s99
      %p106 = scmp.eq.s32.totalorder %s26, 1
      %p107 = por %p105, %p106
      %p108 = scmp.ne.s32.totalorder %s99, %s100
      %p109 = scmp.eq.s32.totalorder %s26, 0
      %p110 = por %p108, %p109
      %p111 = scmp.ne.s32.totalorder %s99, %s100
      %p112 = scmp.eq.s32.totalorder %s27, 1
      %p113 = por %p111, %p112
      %p115 = scmp.ne.s32.totalorder %s100, %s114
      %p116 = scmp.eq.s32.totalorder %s27, 0
      %p117 = por %p115, %p116
      %s119 = sadd.s32 %s118, 1
      %p122 = scmp.eq.s32.totalorder %s21, 1
      %p123 = scmp.ne.s32.totalorder %s118, %s120
      %p124 = scmp.eq.s32.totalorder %s21, 0
      %p125 = por %p123, %p124
      %p126 = scmp.ne.s32.totalorder %s118, %s120
      %p127 = scmp.eq.s32.totalorder %s26, 1
      %p128 = por %p126, %p127
      %p129 = scmp.ne.s32.totalorder %s120, %s121
      %p130 = scmp.eq.s32.totalorder %s26, 0
      %p131 = por %p129, %p130
      %p132 = scmp.ne.s32.totalorder %s120, %s121
      %p133 = scmp.eq.s32.totalorder %s27, 1
      %p134 = por %p132, %p133
      %p136 = scmp.ne.s32.totalorder %s121, %s135
      %p137 = scmp.eq.s32.totalorder %s27, 0
      %p138 = por %p136, %p137
      %s139 = ssub.s32 %s21, %s28
      %p140 = scmp.eq.s32.totalorder %s139, 0
      %s142 = sadd.s32 %s141, 1
      %s143 = scalar_select %p140, %s141, %s142
      %p146 = pneg %p140
      %p147 = scmp.eq.s32.totalorder %s21, 1
      %p148 = por %p146, %p147
      %p149 = scmp.ne.s32.totalorder %s141, %s144
      %p150 = scmp.eq.s32.totalorder %s21, 0
      %p151 = por %p149, %p150
      %p152 = scmp.ne.s32.totalorder %s141, %s144
      %p153 = scmp.eq.s32.totalorder %s26, 1
      %p154 = por %p152, %p153
      %p155 = scmp.ne.s32.totalorder %s144, %s145
      %p156 = scmp.eq.s32.totalorder %s26, 0
      %p157 = por %p155, %p156
      %p158 = scmp.ne.s32.totalorder %s144, %s145
      %p159 = scmp.eq.s32.totalorder %s27, 1
      %p160 = por %p158, %p159
      %p162 = scmp.ne.s32.totalorder %s145, %s161
      %p163 = scmp.eq.s32.totalorder %s27, 0
      %p164 = por %p162, %p163
      %s165 = ssub.s32 %s21, %s28
      %p166 = scmp.eq.s32.totalorder %s165, 0
      %s168 = sadd.s32 %s167, 1
      %s169 = scalar_select %p166, %s167, %s168
      %p172 = pneg %p166
      %p173 = scmp.eq.s32.totalorder %s21, 1
      %p174 = por %p172, %p173
      %p175 = scmp.ne.s32.totalorder %s167, %s170
      %p176 = scmp.eq.s32.totalorder %s21, 0
      %p177 = por %p175, %p176
      %p178 = scmp.ne.s32.totalorder %s167, %s170
      %p179 = scmp.eq.s32.totalorder %s26, 1
      %p180 = por %p178, %p179
      %p181 = scmp.ne.s32.totalorder %s170, %s171
      %p182 = scmp.eq.s32.totalorder %s26, 0
      %p183 = por %p181, %p182
      %p184 = scmp.ne.s32.totalorder %s170, %s171
      %p185 = scmp.eq.s32.totalorder %s27, 1
      %p186 = por %p184, %p185
      %p188 = scmp.ne.s32.totalorder %s171, %s187
      %p189 = scmp.eq.s32.totalorder %s27, 0
      %p190 = por %p188, %p189
      %s191 = ssub.s32 %s21, %s28
      %p192 = scmp.eq.s32.totalorder %s191, 0
      %s194 = sadd.s32 %s193, 1
      %s195 = scalar_select %p192, %s193, %s194
      %p198 = pneg %p192
      %p199 = scmp.eq.s32.totalorder %s21, 1
      %p200 = por %p198, %p199
      %p201 = scmp.ne.s32.totalorder %s193, %s196
      %p202 = scmp.eq.s32.totalorder %s21, 0
      %p203 = por %p201, %p202
      %p204 = scmp.ne.s32.totalorder %s193, %s196
      %p205 = scmp.eq.s32.totalorder %s26, 1
      %p206 = por %p204, %p205
      %p207 = scmp.ne.s32.totalorder %s196, %s197
      %p208 = scmp.eq.s32.totalorder %s26, 0
      %p209 = por %p207, %p208
      %p210 = scmp.ne.s32.totalorder %s196, %s197
      %p211 = scmp.eq.s32.totalorder %s27, 1
      %p212 = por %p210, %p211
      %p214 = scmp.ne.s32.totalorder %s197, %s213
      %p215 = scmp.eq.s32.totalorder %s27, 0
      %p216 = por %p214, %p215
      %s217 = ssub.s32 %s21, %s28
      %p218 = scmp.eq.s32.totalorder %s217, 0
      %s220 = sadd.s32 %s219, 1
      %s221 = scalar_select %p218, %s219, %s220
      %p224 = pneg %p218
      %p225 = scmp.eq.s32.totalorder %s21, 1
      %p226 = por %p224, %p225
      %p227 = scmp.ne.s32.totalorder %s219, %s222
      %p228 = scmp.eq.s32.totalorder %s21, 0
      %p229 = por %p227, %p228
      %p230 = scmp.ne.s32.totalorder %s219, %s222
      %p231 = scmp.eq.s32.totalorder %s26, 1
      %p232 = por %p230, %p231
      %p233 = scmp.ne.s32.totalorder %s222, %s223
      %p234 = scmp.eq.s32.totalorder %s26, 0
      %p235 = por %p233, %p234
      %p236 = scmp.ne.s32.totalorder %s222, %s223
      %p237 = scmp.eq.s32.totalorder %s27, 1
      %p238 = por %p236, %p237
      %p240 = scmp.ne.s32.totalorder %s223, %s239
      %p241 = scmp.eq.s32.totalorder %s27, 0
      %p242 = por %p240, %p241
      %p243 = scmp.le.s32.totalorder 1, %s21
      %p244 = scmp.lt.s32.totalorder %s21, 3
      %p245 = pnand %p243, %p244
      %p246 = pneg %p245
      // Predicated region
      $region9: #{tpu_custom_call.1} parent=5 // pred_check
        _
      $region10: #{tpu_custom_call.1} parent=5 // pred_check_branch
        %248 = sbr.rel (%p245) target = $region12
      $region11: #{tpu_custom_call.1} parent=5 // pred_region
        %s249 = ssub.s32 %s21, 1
        // Predicated region
        $region13: #{tpu_custom_call.1} parent=11 // pred_check
          %p250 = pneg %p68
        $region14: #{tpu_custom_call.1} parent=11 // pred_check_branch
          %252 = sbr.rel (%p250) target = $region16
        $region15: #{tpu_custom_call.1} parent=11 // pred_region
          _
        $region16: #{tpu_custom_call.1} parent=11 // pred_fallthru
          _
        // Predicated region
        $region17: #{tpu_custom_call.1} parent=11 // pred_check
          %p253 = pneg %p89
        $region18: #{tpu_custom_call.1} parent=11 // pred_check_branch
          %255 = sbr.rel (%p253) target = $region20
        $region19: #{tpu_custom_call.1} parent=11 // pred_region
          _
        $region20: #{tpu_custom_call.1} parent=11 // pred_fallthru
          _
        // Predicated region
        $region21: #{tpu_custom_call.1} parent=11 // pred_check
          %p256 = pneg %p110
        $region22: #{tpu_custom_call.1} parent=11 // pred_check_branch
          %258 = sbr.rel (%p256) target = $region24
        $region23: #{tpu_custom_call.1} parent=11 // pred_region
          _
        $region24: #{tpu_custom_call.1} parent=11 // pred_fallthru
          _
        // Predicated region
        $region25: #{tpu_custom_call.1} parent=11 // pred_check
          %p259 = pneg %p131
        $region26: #{tpu_custom_call.1} parent=11 // pred_check_branch
          %261 = sbr.rel (%p259) target = $region28
        $region27: #{tpu_custom_call.1} parent=11 // pred_region
          _
        $region28: #{tpu_custom_call.1} parent=11 // pred_fallthru
          _
      $region12: #{tpu_custom_call.1} parent=5 // pred_fallthru
        _
      %p262 = scmp.lt.s32.totalorder %s21, 2
      // Predicated region
      $region29: #{tpu_custom_call.1} parent=5 // pred_check
        %p263 = pneg %p262
      $region30: #{tpu_custom_call.1} parent=5 // pred_check_branch
        %265 = sbr.rel (%p263) target = $region32
      $region31: #{tpu_custom_call.1} parent=5 // pred_region
        // Predicated region
        $region33: #{tpu_custom_call.1} parent=31 // pred_check
          %p266 = pneg %p41
        $region34: #{tpu_custom_call.1} parent=31 // pred_check_branch
          %268 = sbr.rel (%p266) target = $region36
        $region35: #{tpu_custom_call.1} parent=31 // pred_region
          %s269 = smul.u32 32, %s21
          %p270 = scmp.lt.s32.totalorder %s269, 63
          %s271 = scalar_select %p270, %s269, 63
          %s272 = smul.addr %s271, 8
          %s273 = scalar_lea.vmem %s0, %s272
          %s274 = smul.u32 32, %s21
        $region36: #{tpu_custom_call.1} parent=31 // pred_fallthru
          _
      $region32: #{tpu_custom_call.1} parent=5 // pred_fallthru
        _
      %p275 = scmp.le.s32.totalorder 1, %s21
      %p276 = scmp.lt.s32.totalorder %s21, 3
      %p277 = pnand %p275, %p276
      %p278 = pneg %p277
      // Predicated region
      $region37: #{tpu_custom_call.1} parent=5 // pred_check
        _
      $region38: #{tpu_custom_call.1} parent=5 // pred_check_branch
        %280 = sbr.rel (%p277) target = $region40
      $region39: #{tpu_custom_call.1} parent=5 // pred_region
        %s281 = ssub.s32 %s21, 1
        %s282 = smul.u32 32, %s26
        %p283 = scmp.lt.s32.totalorder %s282, 63
        %s284 = scalar_select %p283, %s282, 63
        %s285 = smul.addr %s284, 8
        %s286 = scalar_lea.vmem %s0, %s285
        %p287 = pneg %p47
        %p288 = pneg %p44
        %p289 = pneg %p68
        %p290 = pneg %p65
        %p291 = pneg %p89
        %p292 = pneg %p86
        %p293 = pneg %p110
        %p294 = pneg %p107
        %p295 = pneg %p131
        %p296 = pneg %p128
        %p297 = pneg %p157
        %p298 = pneg %p154
        %s299 = smul.u32 32, %s26
        %p300 = scmp.lt.s32.totalorder %s299, 63
        %s301 = scalar_select %p300, %s299, 63
        %s302 = smul.addr %s301, 8
        %s303 = scalar_lea.vmem %s5, %s302
        %p304 = pneg %p183
        %p305 = pneg %p180
        %s306 = smul.u32 32, %s26
        %p307 = scmp.lt.s32.totalorder %s306, 63
        %s308 = scalar_select %p307, %s306, 63
        %s309 = smul.addr %s308, 8
        %s310 = scalar_lea.vmem %s6, %s309
        %p311 = pneg %p209
        %p312 = pneg %p206
        %s313 = sand.u32 %s196, 1
        %s314 = scalar_lea.sflag [#allocation3], %s313
        %s315 = sand.u32 %s196, 1
        %s316 = scalar_lea.vmem [#allocation2], %s315
        %p317 = pneg %p235
        %p318 = pneg %p232
        %s319 = sand.u32 %s222, 1
        %s320 = scalar_lea.sflag [#allocation5], %s319
        %s321 = sand.u32 %s222, 1
        %s322 = scalar_lea.vmem [#allocation4], %s321
        %s323 = smul.u32 32, %s26
        %p324 = scmp.lt.s32.totalorder %s323, 63
        %s325 = scalar_select %p324, %s323, 63
        %s326 = smul.addr %s325, 8
        %s327 = scalar_lea.vmem %s0, %s326
        %s328 = smul.u32 32, %s26
        %s329 = smul.u32 32, %s26
        %p330 = scmp.lt.s32.totalorder %s329, 63
        %s331 = scalar_select %p330, %s329, 63
        %s332 = smul.addr %s331, 8
        %s333 = scalar_lea.vmem %s5, %s332
        %s334 = smul.u32 32, %s26
        %s335 = smul.u32 32, %s26
        %p336 = scmp.lt.s32.totalorder %s335, 63
        %s337 = scalar_select %p336, %s335, 63
        %s338 = smul.addr %s337, 8
        %s339 = scalar_lea.vmem %s6, %s338
        %s340 = smul.u32 32, %s26
        %v341 = vld [vmem:[%s327] sm:$0xff]
        %v342 = vld [vmem:[%s327 + $0x8] sm:$0xff]
        %v343 = vld [vmem:[%s327 + $0x10] sm:$0xff]
        %v344 = vld [vmem:[%s327 + $0x18] sm:$0xff]
        %v345 = vld [vmem:[%s327 + $0x20] sm:$0xff]
        %v346 = vld [vmem:[%s327 + $0x28] sm:$0xff]
        %v347 = vld [vmem:[%s327 + $0x30] sm:$0xff]
        %v348 = vld [vmem:[%s327 + $0x38] sm:$0xff]
        %v349 = vld [vmem:[%s327 + $0x40] sm:$0xff]
        %v350 = vld [vmem:[%s327 + $0x48] sm:$0xff]
        %v351 = vld [vmem:[%s327 + $0x50] sm:$0xff]
        %v352 = vld [vmem:[%s327 + $0x58] sm:$0xff]
        %v353 = vld [vmem:[%s327 + $0x60] sm:$0xff]
        %v354 = vld [vmem:[%s327 + $0x68] sm:$0xff]
        %v355 = vld [vmem:[%s327 + $0x70] sm:$0xff]
        %v356 = vld [vmem:[%s327 + $0x78] sm:$0xff]
        %v357 = vld [vmem:[%s327 + $0x80] sm:$0xff]
        %v358 = vld [vmem:[%s327 + $0x88] sm:$0xff]
        %v359 = vld [vmem:[%s327 + $0x90] sm:$0xff]
        %v360 = vld [vmem:[%s327 + $0x98] sm:$0xff]
        %v361 = vld [vmem:[%s327 + $0xa0] sm:$0xff]
        %v362 = vld [vmem:[%s327 + $0xa8] sm:$0xff]
        %v363 = vld [vmem:[%s327 + $0xb0] sm:$0xff]
        %v364 = vld [vmem:[%s327 + $0xb8] sm:$0xff]
        %v365 = vld [vmem:[%s327 + $0xc0] sm:$0xff]
        %v366 = vld [vmem:[%s327 + $0xc8] sm:$0xff]
        %v367 = vld [vmem:[%s327 + $0xd0] sm:$0xff]
        %v368 = vld [vmem:[%s327 + $0xd8] sm:$0xff]
        %v369 = vld [vmem:[%s327 + $0xe0] sm:$0xff]
        %v370 = vld [vmem:[%s327 + $0xe8] sm:$0xff]
        %v371 = vld [vmem:[%s327 + $0xf0] sm:$0xff]
        %v372 = vld [vmem:[%s327 + $0xf8] sm:$0xff]
        %s373 = smul.u32 %s26, 256
        %v374 = vlaneseq
        %v375 = vshrl.u32 %v374, 7
        %v376 = vadd.s32 %v375, 8
        %v377 = vadd.s32 %v375, 16
        %v378 = vadd.s32 %v375, 24
        %v379 = vadd.s32 %v375, 32
        %v380 = vadd.s32 %v375, 40
        %v381 = vadd.s32 %v375, 48
        %v382 = vadd.s32 %v375, 56
        %v383 = vadd.s32 %v375, 64
        %v384 = vadd.s32 %v375, 72
        %v385 = vadd.s32 %v375, 80
        %v386 = vadd.s32 %v375, 88
        %v387 = vadd.s32 %v375, 96
        %v388 = vadd.s32 %v375, 104
        %v389 = vadd.s32 %v375, 112
        %v390 = vadd.s32 %v375, 120
        %v391 = vadd.s32 %v375, 128
        %v392 = vadd.s32 %v375, 136
        %v393 = vadd.s32 %v375, 144
        %v394 = vadd.s32 %v375, 152
        %v395 = vadd.s32 %v375, 160
        %v396 = vadd.s32 %v375, 168
        %v397 = vadd.s32 %v375, 176
        %v398 = vadd.s32 %v375, 184
        %v399 = vadd.s32 %v375, 192
        %v400 = vadd.s32 %v375, 200
        %v401 = vadd.s32 %v375, 208
        %v402 = vadd.s32 %v375, 216
        %v403 = vadd.s32 %v375, 224
        %v404 = vadd.s32 %v375, 232
        %v405 = vadd.s32 %v375, 240
        %v406 = vadd.s32 %v375, 248
        %v407 = vstv %s373
        %v408 = vadd.s32 %v407, %v375
        %v409 = vadd.s32 %v407, %v376
        %v410 = vadd.s32 %v407, %v377
        %v411 = vadd.s32 %v407, %v378
        %v412 = vadd.s32 %v407, %v379
        %v413 = vadd.s32 %v407, %v380
        %v414 = vadd.s32 %v407, %v381
        %v415 = vadd.s32 %v407, %v382
        %v416 = vadd.s32 %v407, %v383
        %v417 = vadd.s32 %v407, %v384
        %v418 = vadd.s32 %v407, %v385
        %v419 = vadd.s32 %v407, %v386
        %v420 = vadd.s32 %v407, %v387
        %v421 = vadd.s32 %v407, %v388
        %v422 = vadd.s32 %v407, %v389
        %v423 = vadd.s32 %v407, %v390
        %v424 = vadd.s32 %v407, %v391
        %v425 = vadd.s32 %v407, %v392
        %v426 = vadd.s32 %v407, %v393
        %v427 = vadd.s32 %v407, %v394
        %v428 = vadd.s32 %v407, %v395
        %v429 = vadd.s32 %v407, %v396
        %v430 = vadd.s32 %v407, %v397
        %v431 = vadd.s32 %v407, %v398
        %v432 = vadd.s32 %v407, %v399
        %v433 = vadd.s32 %v407, %v400
        %v434 = vadd.s32 %v407, %v401
        %v435 = vadd.s32 %v407, %v402
        %v436 = vadd.s32 %v407, %v403
        %v437 = vadd.s32 %v407, %v404
        %v438 = vadd.s32 %v407, %v405
        %v439 = vadd.s32 %v407, %v406
        %vm440 = vcmp.lt.s32.totalorder %v408, 500
        %vm441 = vcmp.lt.s32.totalorder %v409, 500
        %vm442 = vcmp.lt.s32.totalorder %v410, 500
        %vm443 = vcmp.lt.s32.totalorder %v411, 500
        %vm444 = vcmp.lt.s32.totalorder %v412, 500
        %vm445 = vcmp.lt.s32.totalorder %v413, 500
        %vm446 = vcmp.lt.s32.totalorder %v414, 500
        %vm447 = vcmp.lt.s32.totalorder %v415, 500
        %vm448 = vcmp.lt.s32.totalorder %v416, 500
        %vm449 = vcmp.lt.s32.totalorder %v417, 500
        %vm450 = vcmp.lt.s32.totalorder %v418, 500
        %vm451 = vcmp.lt.s32.totalorder %v419, 500
        %vm452 = vcmp.lt.s32.totalorder %v420, 500
        %vm453 = vcmp.lt.s32.totalorder %v421, 500
        %vm454 = vcmp.lt.s32.totalorder %v422, 500
        %vm455 = vcmp.lt.s32.totalorder %v423, 500
        %vm456 = vcmp.lt.s32.totalorder %v424, 500
        %vm457 = vcmp.lt.s32.totalorder %v425, 500
        %vm458 = vcmp.lt.s32.totalorder %v426, 500
        %vm459 = vcmp.lt.s32.totalorder %v427, 500
        %vm460 = vcmp.lt.s32.totalorder %v428, 500
        %vm461 = vcmp.lt.s32.totalorder %v429, 500
        %vm462 = vcmp.lt.s32.totalorder %v430, 500
        %vm463 = vcmp.lt.s32.totalorder %v431, 500
        %vm464 = vcmp.lt.s32.totalorder %v432, 500
        %vm465 = vcmp.lt.s32.totalorder %v433, 500
        %vm466 = vcmp.lt.s32.totalorder %v434, 500
        %vm467 = vcmp.lt.s32.totalorder %v435, 500
        %vm468 = vcmp.lt.s32.totalorder %v436, 500
        %vm469 = vcmp.lt.s32.totalorder %v437, 500
        %vm470 = vcmp.lt.s32.totalorder %v438, 500
        %vm471 = vcmp.lt.s32.totalorder %v439, 500
        %v472 = vld [vmem:[%s4] sm:$0xff]
        %v473 = vld [vmem:[%s4 + $0x8] sm:$0xff]
        %v474 = vld [vmem:[%s4 + $0x10] sm:$0xff]
        %v475 = vld [vmem:[%s4 + $0x18] sm:$0xff]
        %vm476 = vcmask 261120
        %v478 = vsel %vm476, %v341, 0
        %v481 = vsel %vm476, %v342, 0
        %v484 = vsel %vm476, %v343, 0
        %v487 = vsel %vm476, %v344, 0
        %v490 = vsel %vm476, %v345, 0
        %v493 = vsel %vm476, %v346, 0
        %v496 = vsel %vm476, %v347, 0
        %v499 = vsel %vm476, %v348, 0
        %v502 = vsel %vm476, %v349, 0
        %v505 = vsel %vm476, %v350, 0
        %v508 = vsel %vm476, %v351, 0
        %v511 = vsel %vm476, %v352, 0
        %v514 = vsel %vm476, %v353, 0
        %v517 = vsel %vm476, %v354, 0
        %v520 = vsel %vm476, %v355, 0
        %v523 = vsel %vm476, %v356, 0
        %v526 = vsel %vm476, %v357, 0
        %v529 = vsel %vm476, %v358, 0
        %v532 = vsel %vm476, %v359, 0
        %v535 = vsel %vm476, %v360, 0
        %v538 = vsel %vm476, %v361, 0
        %v541 = vsel %vm476, %v362, 0
        %v544 = vsel %vm476, %v363, 0
        %v547 = vsel %vm476, %v364, 0
        %v550 = vsel %vm476, %v365, 0
        %v553 = vsel %vm476, %v366, 0
        %v556 = vsel %vm476, %v367, 0
        %v559 = vsel %vm476, %v368, 0
        %v562 = vsel %vm476, %v369, 0
        %v565 = vsel %vm476, %v370, 0
        %v568 = vsel %vm476, %v371, 0
        %v571 = vsel %vm476, %v372, 0
        %573 = vmatprep.subr.mxu0 0.0
        %574 = vmatpush1.msra.mxu0 %v472
        %575 = vmatprep.subr.mxu0 0.0
        %576 = vmatpush1.msra.mxu0 %v473
        %577 = vmatprep.subr.mxu0 0.0
        %578 = vmatpush1.msra.mxu0 %v474
        %579 = vmatprep.subr.mxu0 0.0
        %580 = vmatpush1.msra.mxu0 %v475
        %581 = vmatprep.subr.mxu0 0.0
        %582 = vmatpush1.msra.mxu0 0.0
        %583 = vmatprep.subr.mxu0 0.0
        %584 = vmatpush1.msra.mxu0 0.0
        %585 = vmatprep.subr.mxu0 0.0
        %586 = vmatpush1.msra.mxu0 0.0
        %587 = vmatprep.subr.mxu0 0.0
        %588 = vmatpush1.msra.mxu0 0.0
        %589 = vmatprep.subr.mxu0 0.0
        %590 = vmatpush1.msra.mxu0 0.0
        %591 = vmatprep.subr.mxu0 0.0
        %592 = vmatpush1.msra.mxu0 0.0
        %593 = vmatprep.subr.mxu0 0.0
        %594 = vmatpush1.msra.mxu0 0.0
        %595 = vmatprep.subr.mxu0 0.0
        %596 = vmatpush1.msra.mxu0 0.0
        %597 = vmatprep.subr.mxu0 0.0
        %598 = vmatpush1.msra.mxu0 0.0
        %599 = vmatprep.subr.mxu0 0.0
        %600 = vmatpush1.msra.mxu0 0.0
        %601 = vmatprep.subr.mxu0 0.0
        %602 = vmatpush1.msra.mxu0 0.0
        %603 = vmatprep.subr.mxu0 0.0
        %604 = vmatpush1.msra.mxu0 0.0
        %605 = vmatprep.subr.mxu0 0.0
        %606 = vmatpush1.msra.mxu0 0.0
        %607 = vmatprep.subr.mxu0 0.0
        %608 = vmatpush1.msra.mxu0 0.0
        %609 = vmatprep.subr.mxu0 0.0
        %610 = vmatpush1.msra.mxu0 0.0
        %611 = vmatprep.subr.mxu0 0.0
        %612 = vmatpush1.msra.mxu0 0.0
        %613 = vmatprep.subr.mxu0 0.0
        %614 = vmatpush1.msra.mxu0 0.0
        %615 = vmatprep.subr.mxu0 0.0
        %616 = vmatpush1.msra.mxu0 0.0
        %617 = vmatprep.subr.mxu0 0.0
        %618 = vmatpush1.msra.mxu0 0.0
        %619 = vmatprep.subr.mxu0 0.0
        %620 = vmatpush1.msra.mxu0 0.0
        %621 = vmatprep.subr.mxu0 0.0
        %622 = vmatpush1.msra.mxu0 0.0
        %623 = vmatprep.subr.mxu0 0.0
        %624 = vmatpush1.msra.mxu0 0.0
        %625 = vmatprep.subr.mxu0 0.0
        %626 = vmatpush1.msra.mxu0 0.0
        %627 = vmatprep.subr.mxu0 0.0
        %628 = vmatpush1.msra.mxu0 0.0
        %629 = vmatprep.subr.mxu0 0.0
        %630 = vmatpush1.msra.mxu0 0.0
        %631 = vmatprep.subr.mxu0 0.0
        %632 = vmatpush1.msra.mxu0 0.0
        %633 = vmatprep.subr.mxu0 0.0
        %634 = vmatpush1.msra.mxu0 0.0
        %635 = vmatprep.subr.mxu0 0.0
        %636 = vmatpush1.msra.mxu0 0.0
        %637 = vmatprep.mubr.f32.mxu0 0.0
        %638 = vmatmul.mubr.f32.gmra.mrb[0].mxu0 %v478
        %v639 = vpop.f32.mrb[0].mxu0
        %v640 = vadd.f32 0.0, %v639
        %v641 = vpop.f32.mrb[0].mxu0
        %642 = vmatprep.mubr.f32.mxu0 0.0
        %643 = vmatmul.mubr.f32.gmra.mrb[0].mxu0 %v481
        %v644 = vpop.f32.mrb[0].mxu0
        %v645 = vadd.f32 0.0, %v644
        %v646 = vpop.f32.mrb[0].mxu0
        %647 = vmatprep.mubr.f32.mxu0 0.0
        %648 = vmatmul.mubr.f32.gmra.mrb[0].mxu0 %v484
        %v649 = vpop.f32.mrb[0].mxu0
        %v650 = vadd.f32 0.0, %v649
        %v651 = vpop.f32.mrb[0].mxu0
        %652 = vmatprep.mubr.f32.mxu0 0.0
        %653 = vmatmul.mubr.f32.gmra.mrb[0].mxu0 %v487
        %v654 = vpop.f32.mrb[0].mxu0
        %v655 = vadd.f32 0.0, %v654
        %v656 = vpop.f32.mrb[0].mxu0
        %657 = vmatprep.mubr.f32.mxu0 0.0
        %658 = vmatmul.mubr.f32.gmra.mrb[0].mxu0 %v490
        %v659 = vpop.f32.mrb[0].mxu0
        %v660 = vadd.f32 0.0, %v659
        %v661 = vpop.f32.mrb[0].mxu0
        %662 = vmatprep.mubr.f32.mxu0 0.0
        %663 = vmatmul.mubr.f32.gmra.mrb[0].mxu0 %v493
        %v664 = vpop.f32.mrb[0].mxu0
        %v665 = vadd.f32 0.0, %v664
        %v666 = vpop.f32.mrb[0].mxu0
        %667 = vmatprep.mubr.f32.mxu0 0.0
        %668 = vmatmul.mubr.f32.gmra.mrb[0].mxu0 %v496
        %v669 = vpop.f32.mrb[0].mxu0
        %v670 = vadd.f32 0.0, %v669
        %v671 = vpop.f32.mrb[0].mxu0
        %672 = vmatprep.mubr.f32.mxu0 0.0
        %673 = vmatmul.mubr.f32.gmra.mrb[0].mxu0 %v499
        %v674 = vpop.f32.mrb[0].mxu0
        %v675 = vadd.f32 0.0, %v674
        %v676 = vpop.f32.mrb[0].mxu0
        %677 = vmatprep.mubr.f32.mxu0 0.0
        %678 = vmatmul.mubr.f32.gmra.mrb[0].mxu0 %v502
        %v679 = vpop.f32.mrb[0].mxu0
        %v680 = vadd.f32 0.0, %v679
        %v681 = vpop.f32.mrb[0].mxu0
        %682 = vmatprep.mubr.f32.mxu0 0.0
        %683 = vmatmul.mubr.f32.gmra.mrb[0].mxu0 %v505
        %v684 = vpop.f32.mrb[0].mxu0
        %v685 = vadd.f32 0.0, %v684
        %v686 = vpop.f32.mrb[0].mxu0
        %687 = vmatprep.mubr.f32.mxu0 0.0
        %688 = vmatmul.mubr.f32.gmra.mrb[0].mxu0 %v508
        %v689 = vpop.f32.mrb[0].mxu0
        %v690 = vadd.f32 0.0, %v689
        %v691 = vpop.f32.mrb[0].mxu0
        %692 = vmatprep.mubr.f32.mxu0 0.0
        %693 = vmatmul.mubr.f32.gmra.mrb[0].mxu0 %v511
        %v694 = vpop.f32.mrb[0].mxu0
        %v695 = vadd.f32 0.0, %v694
        %v696 = vpop.f32.mrb[0].mxu0
        %697 = vmatprep.mubr.f32.mxu0 0.0
        %698 = vmatmul.mubr.f32.gmra.mrb[0].mxu0 %v514
        %v699 = vpop.f32.mrb[0].mxu0
        %v700 = vadd.f32 0.0, %v699
        %v701 = vpop.f32.mrb[0].mxu0
        %702 = vmatprep.mubr.f32.mxu0 0.0
        %703 = vmatmul.mubr.f32.gmra.mrb[0].mxu0 %v517
        %v704 = vpop.f32.mrb[0].mxu0
        %v705 = vadd.f32 0.0, %v704
        %v706 = vpop.f32.mrb[0].mxu0
        %707 = vmatprep.mubr.f32.mxu0 0.0
        %708 = vmatmul.mubr.f32.gmra.mrb[0].mxu0 %v520
        %v709 = vpop.f32.mrb[0].mxu0
        %v710 = vadd.f32 0.0, %v709
        %v711 = vpop.f32.mrb[0].mxu0
        %712 = vmatprep.mubr.f32.mxu0 0.0
        %713 = vmatmul.mubr.f32.gmra.mrb[0].mxu0 %v523
        %v714 = vpop.f32.mrb[0].mxu0
        %v715 = vadd.f32 0.0, %v714
        %v716 = vpop.f32.mrb[0].mxu0
        %717 = vmatprep.mubr.f32.mxu0 0.0
        %718 = vmatmul.mubr.f32.gmra.mrb[0].mxu0 %v526
        %v719 = vpop.f32.mrb[0].mxu0
        %v720 = vadd.f32 0.0, %v719
        %v721 = vpop.f32.mrb[0].mxu0
        %722 = vmatprep.mubr.f32.mxu0 0.0
        %723 = vmatmul.mubr.f32.gmra.mrb[0].mxu0 %v529
        %v724 = vpop.f32.mrb[0].mxu0
        %v725 = vadd.f32 0.0, %v724
        %v726 = vpop.f32.mrb[0].mxu0
        %727 = vmatprep.mubr.f32.mxu0 0.0
        %728 = vmatmul.mubr.f32.gmra.mrb[0].mxu0 %v532
        %v729 = vpop.f32.mrb[0].mxu0
        %v730 = vadd.f32 0.0, %v729
        %v731 = vpop.f32.mrb[0].mxu0
        %732 = vmatprep.mubr.f32.mxu0 0.0
        %733 = vmatmul.mubr.f32.gmra.mrb[0].mxu0 %v535
        %v734 = vpop.f32.mrb[0].mxu0
        %v735 = vadd.f32 0.0, %v734
        %v736 = vpop.f32.mrb[0].mxu0
        %737 = vmatprep.mubr.f32.mxu0 0.0
        %738 = vmatmul.mubr.f32.gmra.mrb[0].mxu0 %v538
        %v739 = vpop.f32.mrb[0].mxu0
        %v740 = vadd.f32 0.0, %v739
        %v741 = vpop.f32.mrb[0].mxu0
        %742 = vmatprep.mubr.f32.mxu0 0.0
        %743 = vmatmul.mubr.f32.gmra.mrb[0].mxu0 %v541
        %v744 = vpop.f32.mrb[0].mxu0
        %v745 = vadd.f32 0.0, %v744
        %v746 = vpop.f32.mrb[0].mxu0
        %747 = vmatprep.mubr.f32.mxu0 0.0
        %748 = vmatmul.mubr.f32.gmra.mrb[0].mxu0 %v544
        %v749 = vpop.f32.mrb[0].mxu0
        %v750 = vadd.f32 0.0, %v749
        %v751 = vpop.f32.mrb[0].mxu0
        %752 = vmatprep.mubr.f32.mxu0 0.0
        %753 = vmatmul.mubr.f32.gmra.mrb[0].mxu0 %v547
        %v754 = vpop.f32.mrb[0].mxu0
        %v755 = vadd.f32 0.0, %v754
        %v756 = vpop.f32.mrb[0].mxu0
        %757 = vmatprep.mubr.f32.mxu0 0.0
        %758 = vmatmul.mubr.f32.gmra.mrb[0].mxu0 %v550
        %v759 = vpop.f32.mrb[0].mxu0
        %v760 = vadd.f32 0.0, %v759
        %v761 = vpop.f32.mrb[0].mxu0
        %762 = vmatprep.mubr.f32.mxu0 0.0
        %763 = vmatmul.mubr.f32.gmra.mrb[0].mxu0 %v553
        %v764 = vpop.f32.mrb[0].mxu0
        %v765 = vadd.f32 0.0, %v764
        %v766 = vpop.f32.mrb[0].mxu0
        %767 = vmatprep.mubr.f32.mxu0 0.0
        %768 = vmatmul.mubr.f32.gmra.mrb[0].mxu0 %v556
        %v769 = vpop.f32.mrb[0].mxu0
        %v770 = vadd.f32 0.0, %v769
        %v771 = vpop.f32.mrb[0].mxu0
        %772 = vmatprep.mubr.f32.mxu0 0.0
        %773 = vmatmul.mubr.f32.gmra.mrb[0].mxu0 %v559
        %v774 = vpop.f32.mrb[0].mxu0
        %v775 = vadd.f32 0.0, %v774
        %v776 = vpop.f32.mrb[0].mxu0
        %777 = vmatprep.mubr.f32.mxu0 0.0
        %778 = vmatmul.mubr.f32.gmra.mrb[0].mxu0 %v562
        %v779 = vpop.f32.mrb[0].mxu0
        %v780 = vadd.f32 0.0, %v779
        %v781 = vpop.f32.mrb[0].mxu0
        %782 = vmatprep.mubr.f32.mxu0 0.0
        %783 = vmatmul.mubr.f32.gmra.mrb[0].mxu0 %v565
        %v784 = vpop.f32.mrb[0].mxu0
        %v785 = vadd.f32 0.0, %v784
        %v786 = vpop.f32.mrb[0].mxu0
        %787 = vmatprep.mubr.f32.mxu0 0.0
        %788 = vmatmul.mubr.f32.gmra.mrb[0].mxu0 %v568
        %v789 = vpop.f32.mrb[0].mxu0
        %v790 = vadd.f32 0.0, %v789
        %v791 = vpop.f32.mrb[0].mxu0
        %792 = vmatprep.mubr.f32.mxu0 0.0
        %793 = vmatmul.mubr.f32.gmra.mrb[0].mxu0 %v571
        %v794 = vpop.f32.mrb[0].mxu0
        %v795 = vadd.f32 0.0, %v794
        %v796 = vpop.f32.mrb[0].mxu0
        %797 = vdwg.mxu0
        %v798 = vsel %vm440, 1, 0
        %v799 = vsel %vm441, 1, 0
        %v800 = vsel %vm442, 1, 0
        %v801 = vsel %vm443, 1, 0
        %v802 = vsel %vm444, 1, 0
        %v803 = vsel %vm445, 1, 0
        %v804 = vsel %vm446, 1, 0
        %v805 = vsel %vm447, 1, 0
        %v806 = vsel %vm448, 1, 0
        %v807 = vsel %vm449, 1, 0
        %v808 = vsel %vm450, 1, 0
        %v809 = vsel %vm451, 1, 0
        %v810 = vsel %vm452, 1, 0
        %v811 = vsel %vm453, 1, 0
        %v812 = vsel %vm454, 1, 0
        %v813 = vsel %vm455, 1, 0
        %v814 = vsel %vm456, 1, 0
        %v815 = vsel %vm457, 1, 0
        %v816 = vsel %vm458, 1, 0
        %v817 = vsel %vm459, 1, 0
        %v818 = vsel %vm460, 1, 0
        %v819 = vsel %vm461, 1, 0
        %v820 = vsel %vm462, 1, 0
        %v821 = vsel %vm463, 1, 0
        %v822 = vsel %vm464, 1, 0
        %v823 = vsel %vm465, 1, 0
        %v824 = vsel %vm466, 1, 0
        %v825 = vsel %vm467, 1, 0
        %v826 = vsel %vm468, 1, 0
        %v827 = vsel %vm469, 1, 0
        %v828 = vsel %vm470, 1, 0
        %v829 = vsel %vm471, 1, 0
        %vm830 = vcmp.eq.s32.totalorder %v798, 1
        %vm831 = vcmp.eq.s32.totalorder %v799, 1
        %vm832 = vcmp.eq.s32.totalorder %v800, 1
        %vm833 = vcmp.eq.s32.totalorder %v801, 1
        %vm834 = vcmp.eq.s32.totalorder %v802, 1
        %vm835 = vcmp.eq.s32.totalorder %v803, 1
        %vm836 = vcmp.eq.s32.totalorder %v804, 1
        %vm837 = vcmp.eq.s32.totalorder %v805, 1
        %vm838 = vcmp.eq.s32.totalorder %v806, 1
        %vm839 = vcmp.eq.s32.totalorder %v807, 1
        %vm840 = vcmp.eq.s32.totalorder %v808, 1
        %vm841 = vcmp.eq.s32.totalorder %v809, 1
        %vm842 = vcmp.eq.s32.totalorder %v810, 1
        %vm843 = vcmp.eq.s32.totalorder %v811, 1
        %vm844 = vcmp.eq.s32.totalorder %v812, 1
        %vm845 = vcmp.eq.s32.totalorder %v813, 1
        %vm846 = vcmp.eq.s32.totalorder %v814, 1
        %vm847 = vcmp.eq.s32.totalorder %v815, 1
        %vm848 = vcmp.eq.s32.totalorder %v816, 1
        %vm849 = vcmp.eq.s32.totalorder %v817, 1
        %vm850 = vcmp.eq.s32.totalorder %v818, 1
        %vm851 = vcmp.eq.s32.totalorder %v819, 1
        %vm852 = vcmp.eq.s32.totalorder %v820, 1
        %vm853 = vcmp.eq.s32.totalorder %v821, 1
        %vm854 = vcmp.eq.s32.totalorder %v822, 1
        %vm855 = vcmp.eq.s32.totalorder %v823, 1
        %vm856 = vcmp.eq.s32.totalorder %v824, 1
        %vm857 = vcmp.eq.s32.totalorder %v825, 1
        %vm858 = vcmp.eq.s32.totalorder %v826, 1
        %vm859 = vcmp.eq.s32.totalorder %v827, 1
        %vm860 = vcmp.eq.s32.totalorder %v828, 1
        %vm861 = vcmp.eq.s32.totalorder %v829, 1
        %v862 = vsel %vm830, %v640, 0.0
        %v863 = vsel %vm831, %v645, 0.0
        %v864 = vsel %vm832, %v650, 0.0
        %v865 = vsel %vm833, %v655, 0.0
        %v866 = vsel %vm834, %v660, 0.0
        %v867 = vsel %vm835, %v665, 0.0
        %v868 = vsel %vm836, %v670, 0.0
        %v869 = vsel %vm837, %v675, 0.0
        %v870 = vsel %vm838, %v680, 0.0
        %v871 = vsel %vm839, %v685, 0.0
        %v872 = vsel %vm840, %v690, 0.0
        %v873 = vsel %vm841, %v695, 0.0
        %v874 = vsel %vm842, %v700, 0.0
        %v875 = vsel %vm843, %v705, 0.0
        %v876 = vsel %vm844, %v710, 0.0
        %v877 = vsel %vm845, %v715, 0.0
        %v878 = vsel %vm846, %v720, 0.0
        %v879 = vsel %vm847, %v725, 0.0
        %v880 = vsel %vm848, %v730, 0.0
        %v881 = vsel %vm849, %v735, 0.0
        %v882 = vsel %vm850, %v740, 0.0
        %v883 = vsel %vm851, %v745, 0.0
        %v884 = vsel %vm852, %v750, 0.0
        %v885 = vsel %vm853, %v755, 0.0
        %v886 = vsel %vm854, %v760, 0.0
        %v887 = vsel %vm855, %v765, 0.0
        %v888 = vsel %vm856, %v770, 0.0
        %v889 = vsel %vm857, %v775, 0.0
        %v890 = vsel %vm858, %v780, 0.0
        %v891 = vsel %vm859, %v785, 0.0
        %v892 = vsel %vm860, %v790, 0.0
        %v893 = vsel %vm861, %v795, 0.0
        %vm894 = vcmask 39936
        %895 = vst.msk [vmem:[%s339] sm:$0xff] %vm894, %v862
        %896 = vst.msk [vmem:[%s339 + $0x8] sm:$0xff] %vm894, %v863
        %897 = vst.msk [vmem:[%s339 + $0x10] sm:$0xff] %vm894, %v864
        %898 = vst.msk [vmem:[%s339 + $0x18] sm:$0xff] %vm894, %v865
        %899 = vst.msk [vmem:[%s339 + $0x20] sm:$0xff] %vm894, %v866
        %900 = vst.msk [vmem:[%s339 + $0x28] sm:$0xff] %vm894, %v867
        %901 = vst.msk [vmem:[%s339 + $0x30] sm:$0xff] %vm894, %v868
        %902 = vst.msk [vmem:[%s339 + $0x38] sm:$0xff] %vm894, %v869
        %903 = vst.msk [vmem:[%s339 + $0x40] sm:$0xff] %vm894, %v870
        %904 = vst.msk [vmem:[%s339 + $0x48] sm:$0xff] %vm894, %v871
        %905 = vst.msk [vmem:[%s339 + $0x50] sm:$0xff] %vm894, %v872
        %906 = vst.msk [vmem:[%s339 + $0x58] sm:$0xff] %vm894, %v873
        %907 = vst.msk [vmem:[%s339 + $0x60] sm:$0xff] %vm894, %v874
        %908 = vst.msk [vmem:[%s339 + $0x68] sm:$0xff] %vm894, %v875
        %909 = vst.msk [vmem:[%s339 + $0x70] sm:$0xff] %vm894, %v876
        %910 = vst.msk [vmem:[%s339 + $0x78] sm:$0xff] %vm894, %v877
        %911 = vst.msk [vmem:[%s339 + $0x80] sm:$0xff] %vm894, %v878
        %912 = vst.msk [vmem:[%s339 + $0x88] sm:$0xff] %vm894, %v879
        %913 = vst.msk [vmem:[%s339 + $0x90] sm:$0xff] %vm894, %v880
        %914 = vst.msk [vmem:[%s339 + $0x98] sm:$0xff] %vm894, %v881
        %915 = vst.msk [vmem:[%s339 + $0xa0] sm:$0xff] %vm894, %v882
        %916 = vst.msk [vmem:[%s339 + $0xa8] sm:$0xff] %vm894, %v883
        %917 = vst.msk [vmem:[%s339 + $0xb0] sm:$0xff] %vm894, %v884
        %918 = vst.msk [vmem:[%s339 + $0xb8] sm:$0xff] %vm894, %v885
        %919 = vst.msk [vmem:[%s339 + $0xc0] sm:$0xff] %vm894, %v886
        %920 = vst.msk [vmem:[%s339 + $0xc8] sm:$0xff] %vm894, %v887
        %921 = vst.msk [vmem:[%s339 + $0xd0] sm:$0xff] %vm894, %v888
        %922 = vst.msk [vmem:[%s339 + $0xd8] sm:$0xff] %vm894, %v889
        %923 = vst.msk [vmem:[%s339 + $0xe0] sm:$0xff] %vm894, %v890
        %924 = vst.msk [vmem:[%s339 + $0xe8] sm:$0xff] %vm894, %v891
        %925 = vst.msk [vmem:[%s339 + $0xf0] sm:$0xff] %vm894, %v892
        %926 = vst.msk [vmem:[%s339 + $0xf8] sm:$0xff] %vm894, %v893
        %v927 = vld [vmem:[%s1] sm:$0x1]
        %v929 = vlaneseq
        %v930 = vshrl.u32 %v929, 7
        %v931 = vsub.s32 0, %v930
        %v932 = vrot.slane %v927, %v931
        %v934 = vmul.f32 %v341, %v932
        %v935 = vmul.f32 %v342, %v932
        %v936 = vmul.f32 %v343, %v932
        %v937 = vmul.f32 %v344, %v932
        %v938 = vmul.f32 %v345, %v932
        %v939 = vmul.f32 %v346, %v932
        %v940 = vmul.f32 %v347, %v932
        %v941 = vmul.f32 %v348, %v932
        %v942 = vmul.f32 %v349, %v932
        %v943 = vmul.f32 %v350, %v932
        %v944 = vmul.f32 %v351, %v932
        %v945 = vmul.f32 %v352, %v932
        %v946 = vmul.f32 %v353, %v932
        %v947 = vmul.f32 %v354, %v932
        %v948 = vmul.f32 %v355, %v932
        %v949 = vmul.f32 %v356, %v932
        %v950 = vmul.f32 %v357, %v932
        %v951 = vmul.f32 %v358, %v932
        %v952 = vmul.f32 %v359, %v932
        %v953 = vmul.f32 %v360, %v932
        %v954 = vmul.f32 %v361, %v932
        %v955 = vmul.f32 %v362, %v932
        %v956 = vmul.f32 %v363, %v932
        %v957 = vmul.f32 %v364, %v932
        %v958 = vmul.f32 %v365, %v932
        %v959 = vmul.f32 %v366, %v932
        %v960 = vmul.f32 %v367, %v932
        %v961 = vmul.f32 %v368, %v932
        %v962 = vmul.f32 %v369, %v932
        %v963 = vmul.f32 %v370, %v932
        %v964 = vmul.f32 %v371, %v932
        %v965 = vmul.f32 %v372, %v932
        %v966 = vld [vmem:[%s2] sm:$0x1]
        %v968 = vlaneseq
        %v969 = vshrl.u32 %v968, 7
        %v970 = vsub.s32 0, %v969
        %v971 = vrot.slane %v966, %v970
        %v973 = vadd.f32 %v934, %v971
        %v974 = vadd.f32 %v935, %v971
        %v975 = vadd.f32 %v936, %v971
        %v976 = vadd.f32 %v937, %v971
        %v977 = vadd.f32 %v938, %v971
        %v978 = vadd.f32 %v939, %v971
        %v979 = vadd.f32 %v940, %v971
        %v980 = vadd.f32 %v941, %v971
        %v981 = vadd.f32 %v942, %v971
        %v982 = vadd.f32 %v943, %v971
        %v983 = vadd.f32 %v944, %v971
        %v984 = vadd.f32 %v945, %v971
        %v985 = vadd.f32 %v946, %v971
        %v986 = vadd.f32 %v947, %v971
        %v987 = vadd.f32 %v948, %v971
        %v988 = vadd.f32 %v949, %v971
        %v989 = vadd.f32 %v950, %v971
        %v990 = vadd.f32 %v951, %v971
        %v991 = vadd.f32 %v952, %v971
        %v992 = vadd.f32 %v953, %v971
        %v993 = vadd.f32 %v954, %v971
        %v994 = vadd.f32 %v955, %v971
        %v995 = vadd.f32 %v956, %v971
        %v996 = vadd.f32 %v957, %v971
        %v997 = vadd.f32 %v958, %v971
        %v998 = vadd.f32 %v959, %v971
        %v999 = vadd.f32 %v960, %v971
        %v1000 = vadd.f32 %v961, %v971
        %v1001 = vadd.f32 %v962, %v971
        %v1002 = vadd.f32 %v963, %v971
        %v1003 = vadd.f32 %v964, %v971
        %v1004 = vadd.f32 %v965, %v971
        %v1005 = vmax.f32 %v973, 0.0
        %v1006 = vmax.f32 %v974, 0.0
        %v1007 = vmax.f32 %v975, 0.0
        %v1008 = vmax.f32 %v976, 0.0
        %v1009 = vmax.f32 %v977, 0.0
        %v1010 = vmax.f32 %v978, 0.0
        %v1011 = vmax.f32 %v979, 0.0
        %v1012 = vmax.f32 %v980, 0.0
        %v1013 = vmax.f32 %v981, 0.0
        %v1014 = vmax.f32 %v982, 0.0
        %v1015 = vmax.f32 %v983, 0.0
        %v1016 = vmax.f32 %v984, 0.0
        %v1017 = vmax.f32 %v985, 0.0
        %v1018 = vmax.f32 %v986, 0.0
        %v1019 = vmax.f32 %v987, 0.0
        %v1020 = vmax.f32 %v988, 0.0
        %v1021 = vmax.f32 %v989, 0.0
        %v1022 = vmax.f32 %v990, 0.0
        %v1023 = vmax.f32 %v991, 0.0
        %v1024 = vmax.f32 %v992, 0.0
        %v1025 = vmax.f32 %v993, 0.0
        %v1026 = vmax.f32 %v994, 0.0
        %v1027 = vmax.f32 %v995, 0.0
        %v1028 = vmax.f32 %v996, 0.0
        %v1029 = vmax.f32 %v997, 0.0
        %v1030 = vmax.f32 %v998, 0.0
        %v1031 = vmax.f32 %v999, 0.0
        %v1032 = vmax.f32 %v1000, 0.0
        %v1033 = vmax.f32 %v1001, 0.0
        %v1034 = vmax.f32 %v1002, 0.0
        %v1035 = vmax.f32 %v1003, 0.0
        %v1036 = vmax.f32 %v1004, 0.0
        %v1037 = vld [vmem:[%s3] sm:$0xff]
        %v1038 = vld [vmem:[%s3 + $0x8] sm:$0xff]
        %v1039 = vld [vmem:[%s3 + $0x10] sm:$0xff]
        %v1040 = vld [vmem:[%s3 + $0x18] sm:$0xff]
        %v1042 = vsel %vm476, %v1005, 0
        %v1045 = vsel %vm476, %v1006, 0
        %v1048 = vsel %vm476, %v1007, 0
        %v1051 = vsel %vm476, %v1008, 0
        %v1054 = vsel %vm476, %v1009, 0
        %v1057 = vsel %vm476, %v1010, 0
        %v1060 = vsel %vm476, %v1011, 0
        %v1063 = vsel %vm476, %v1012, 0
        %v1066 = vsel %vm476, %v1013, 0
        %v1069 = vsel %vm476, %v1014, 0
        %v1072 = vsel %vm476, %v1015, 0
        %v1075 = vsel %vm476, %v1016, 0
        %v1078 = vsel %vm476, %v1017, 0
        %v1081 = vsel %vm476, %v1018, 0
        %v1084 = vsel %vm476, %v1019, 0
        %v1087 = vsel %vm476, %v1020, 0
        %v1090 = vsel %vm476, %v1021, 0
        %v1093 = vsel %vm476, %v1022, 0
        %v1096 = vsel %vm476, %v1023, 0
        %v1099 = vsel %vm476, %v1024, 0
        %v1102 = vsel %vm476, %v1025, 0
        %v1105 = vsel %vm476, %v1026, 0
        %v1108 = vsel %vm476, %v1027, 0
        %v1111 = vsel %vm476, %v1028, 0
        %v1114 = vsel %vm476, %v1029, 0
        %v1117 = vsel %vm476, %v1030, 0
        %v1120 = vsel %vm476, %v1031, 0
        %v1123 = vsel %vm476, %v1032, 0
        %v1126 = vsel %vm476, %v1033, 0
        %v1129 = vsel %vm476, %v1034, 0
        %v1132 = vsel %vm476, %v1035, 0
        %v1135 = vsel %vm476, %v1036, 0
        %1137 = vmatprep.subr.mxu0 0.0
        %1138 = vmatpush1.msra.mxu0 %v1037
        %1139 = vmatprep.subr.mxu0 0.0
        %1140 = vmatpush1.msra.mxu0 %v1038
        %1141 = vmatprep.subr.mxu0 0.0
        %1142 = vmatpush1.msra.mxu0 %v1039
        %1143 = vmatprep.subr.mxu0 0.0
        %1144 = vmatpush1.msra.mxu0 %v1040
        %1145 = vmatprep.subr.mxu0 0.0
        %1146 = vmatpush1.msra.mxu0 0.0
        %1147 = vmatprep.subr.mxu0 0.0
        %1148 = vmatpush1.msra.mxu0 0.0
        %1149 = vmatprep.subr.mxu0 0.0
        %1150 = vmatpush1.msra.mxu0 0.0
        %1151 = vmatprep.subr.mxu0 0.0
        %1152 = vmatpush1.msra.mxu0 0.0
        %1153 = vmatprep.subr.mxu0 0.0
        %1154 = vmatpush1.msra.mxu0 0.0
        %1155 = vmatprep.subr.mxu0 0.0
        %1156 = vmatpush1.msra.mxu0 0.0
        %1157 = vmatprep.subr.mxu0 0.0
        %1158 = vmatpush1.msra.mxu0 0.0
        %1159 = vmatprep.subr.mxu0 0.0
        %1160 = vmatpush1.msra.mxu0 0.0
        %1161 = vmatprep.subr.mxu0 0.0
        %1162 = vmatpush1.msra.mxu0 0.0
        %1163 = vmatprep.subr.mxu0 0.0
        %1164 = vmatpush1.msra.mxu0 0.0
        %1165 = vmatprep.subr.mxu0 0.0
        %1166 = vmatpush1.msra.mxu0 0.0
        %1167 = vmatprep.subr.mxu0 0.0
        %1168 = vmatpush1.msra.mxu0 0.0
        %1169 = vmatprep.subr.mxu0 0.0
        %1170 = vmatpush1.msra.mxu0 0.0
        %1171 = vmatprep.subr.mxu0 0.0
        %1172 = vmatpush1.msra.mxu0 0.0
        %1173 = vmatprep.subr.mxu0 0.0
        %1174 = vmatpush1.msra.mxu0 0.0
        %1175 = vmatprep.subr.mxu0 0.0
        %1176 = vmatpush1.msra.mxu0 0.0
        %1177 = vmatprep.subr.mxu0 0.0
        %1178 = vmatpush1.msra.mxu0 0.0
        %1179 = vmatprep.subr.mxu0 0.0
        %1180 = vmatpush1.msra.mxu0 0.0
        %1181 = vmatprep.subr.mxu0 0.0
        %1182 = vmatpush1.msra.mxu0 0.0
        %1183 = vmatprep.subr.mxu0 0.0
        %1184 = vmatpush1.msra.mxu0 0.0
        %1185 = vmatprep.subr.mxu0 0.0
        %1186 = vmatpush1.msra.mxu0 0.0
        %1187 = vmatprep.subr.mxu0 0.0
        %1188 = vmatpush1.msra.mxu0 0.0
        %1189 = vmatprep.subr.mxu0 0.0
        %1190 = vmatpush1.msra.mxu0 0.0
        %1191 = vmatprep.subr.mxu0 0.0
        %1192 = vmatpush1.msra.mxu0 0.0
        %1193 = vmatprep.subr.mxu0 0.0
        %1194 = vmatpush1.msra.mxu0 0.0
        %1195 = vmatprep.subr.mxu0 0.0
        %1196 = vmatpush1.msra.mxu0 0.0
        %1197 = vmatprep.subr.mxu0 0.0
        %1198 = vmatpush1.msra.mxu0 0.0
        %1199 = vmatprep.subr.mxu0 0.0
        %1200 = vmatpush1.msra.mxu0 0.0
        %1201 = vmatprep.mubr.f32.mxu0 0.0
        %1202 = vmatmul.mubr.f32.gmra.mrb[0].mxu0 %v1042
        %v1203 = vpop.f32.mrb[0].mxu0
        %v1204 = vadd.f32 0.0, %v1203
        %v1205 = vpop.f32.mrb[0].mxu0
        %1206 = vmatprep.mubr.f32.mxu0 0.0
        %1207 = vmatmul.mubr.f32.gmra.mrb[0].mxu0 %v1045
        %v1208 = vpop.f32.mrb[0].mxu0
        %v1209 = vadd.f32 0.0, %v1208
        %v1210 = vpop.f32.mrb[0].mxu0
        %1211 = vmatprep.mubr.f32.mxu0 0.0
        %1212 = vmatmul.mubr.f32.gmra.mrb[0].mxu0 %v1048
        %v1213 = vpop.f32.mrb[0].mxu0
        %v1214 = vadd.f32 0.0, %v1213
        %v1215 = vpop.f32.mrb[0].mxu0
        %1216 = vmatprep.mubr.f32.mxu0 0.0
        %1217 = vmatmul.mubr.f32.gmra.mrb[0].mxu0 %v1051
        %v1218 = vpop.f32.mrb[0].mxu0
        %v1219 = vadd.f32 0.0, %v1218
        %v1220 = vpop.f32.mrb[0].mxu0
        %1221 = vmatprep.mubr.f32.mxu0 0.0
        %1222 = vmatmul.mubr.f32.gmra.mrb[0].mxu0 %v1054
        %v1223 = vpop.f32.mrb[0].mxu0
        %v1224 = vadd.f32 0.0, %v1223
        %v1225 = vpop.f32.mrb[0].mxu0
        %1226 = vmatprep.mubr.f32.mxu0 0.0
        %1227 = vmatmul.mubr.f32.gmra.mrb[0].mxu0 %v1057
        %v1228 = vpop.f32.mrb[0].mxu0
        %v1229 = vadd.f32 0.0, %v1228
        %v1230 = vpop.f32.mrb[0].mxu0
        %1231 = vmatprep.mubr.f32.mxu0 0.0
        %1232 = vmatmul.mubr.f32.gmra.mrb[0].mxu0 %v1060
        %v1233 = vpop.f32.mrb[0].mxu0
        %v1234 = vadd.f32 0.0, %v1233
        %v1235 = vpop.f32.mrb[0].mxu0
        %1236 = vmatprep.mubr.f32.mxu0 0.0
        %1237 = vmatmul.mubr.f32.gmra.mrb[0].mxu0 %v1063
        %v1238 = vpop.f32.mrb[0].mxu0
        %v1239 = vadd.f32 0.0, %v1238
        %v1240 = vpop.f32.mrb[0].mxu0
        %1241 = vmatprep.mubr.f32.mxu0 0.0
        %1242 = vmatmul.mubr.f32.gmra.mrb[0].mxu0 %v1066
        %v1243 = vpop.f32.mrb[0].mxu0
        %v1244 = vadd.f32 0.0, %v1243
        %v1245 = vpop.f32.mrb[0].mxu0
        %1246 = vmatprep.mubr.f32.mxu0 0.0
        %1247 = vmatmul.mubr.f32.gmra.mrb[0].mxu0 %v1069
        %v1248 = vpop.f32.mrb[0].mxu0
        %v1249 = vadd.f32 0.0, %v1248
        %v1250 = vpop.f32.mrb[0].mxu0
        %1251 = vmatprep.mubr.f32.mxu0 0.0
        %1252 = vmatmul.mubr.f32.gmra.mrb[0].mxu0 %v1072
        %v1253 = vpop.f32.mrb[0].mxu0
        %v1254 = vadd.f32 0.0, %v1253
        %v1255 = vpop.f32.mrb[0].mxu0
        %1256 = vmatprep.mubr.f32.mxu0 0.0
        %1257 = vmatmul.mubr.f32.gmra.mrb[0].mxu0 %v1075
        %v1258 = vpop.f32.mrb[0].mxu0
        %v1259 = vadd.f32 0.0, %v1258
        %v1260 = vpop.f32.mrb[0].mxu0
        %1261 = vmatprep.mubr.f32.mxu0 0.0
        %1262 = vmatmul.mubr.f32.gmra.mrb[0].mxu0 %v1078
        %v1263 = vpop.f32.mrb[0].mxu0
        %v1264 = vadd.f32 0.0, %v1263
        %v1265 = vpop.f32.mrb[0].mxu0
        %1266 = vmatprep.mubr.f32.mxu0 0.0
        %1267 = vmatmul.mubr.f32.gmra.mrb[0].mxu0 %v1081
        %v1268 = vpop.f32.mrb[0].mxu0
        %v1269 = vadd.f32 0.0, %v1268
        %v1270 = vpop.f32.mrb[0].mxu0
        %1271 = vmatprep.mubr.f32.mxu0 0.0
        %1272 = vmatmul.mubr.f32.gmra.mrb[0].mxu0 %v1084
        %v1273 = vpop.f32.mrb[0].mxu0
        %v1274 = vadd.f32 0.0, %v1273
        %v1275 = vpop.f32.mrb[0].mxu0
        %1276 = vmatprep.mubr.f32.mxu0 0.0
        %1277 = vmatmul.mubr.f32.gmra.mrb[0].mxu0 %v1087
        %v1278 = vpop.f32.mrb[0].mxu0
        %v1279 = vadd.f32 0.0, %v1278
        %v1280 = vpop.f32.mrb[0].mxu0
        %1281 = vmatprep.mubr.f32.mxu0 0.0
        %1282 = vmatmul.mubr.f32.gmra.mrb[0].mxu0 %v1090
        %v1283 = vpop.f32.mrb[0].mxu0
        %v1284 = vadd.f32 0.0, %v1283
        %v1285 = vpop.f32.mrb[0].mxu0
        %1286 = vmatprep.mubr.f32.mxu0 0.0
        %1287 = vmatmul.mubr.f32.gmra.mrb[0].mxu0 %v1093
        %v1288 = vpop.f32.mrb[0].mxu0
        %v1289 = vadd.f32 0.0, %v1288
        %v1290 = vpop.f32.mrb[0].mxu0
        %1291 = vmatprep.mubr.f32.mxu0 0.0
        %1292 = vmatmul.mubr.f32.gmra.mrb[0].mxu0 %v1096
        %v1293 = vpop.f32.mrb[0].mxu0
        %v1294 = vadd.f32 0.0, %v1293
        %v1295 = vpop.f32.mrb[0].mxu0
        %1296 = vmatprep.mubr.f32.mxu0 0.0
        %1297 = vmatmul.mubr.f32.gmra.mrb[0].mxu0 %v1099
        %v1298 = vpop.f32.mrb[0].mxu0
        %v1299 = vadd.f32 0.0, %v1298
        %v1300 = vpop.f32.mrb[0].mxu0
        %1301 = vmatprep.mubr.f32.mxu0 0.0
        %1302 = vmatmul.mubr.f32.gmra.mrb[0].mxu0 %v1102
        %v1303 = vpop.f32.mrb[0].mxu0
        %v1304 = vadd.f32 0.0, %v1303
        %v1305 = vpop.f32.mrb[0].mxu0
        %1306 = vmatprep.mubr.f32.mxu0 0.0
        %1307 = vmatmul.mubr.f32.gmra.mrb[0].mxu0 %v1105
        %v1308 = vpop.f32.mrb[0].mxu0
        %v1309 = vadd.f32 0.0, %v1308
        %v1310 = vpop.f32.mrb[0].mxu0
        %1311 = vmatprep.mubr.f32.mxu0 0.0
        %1312 = vmatmul.mubr.f32.gmra.mrb[0].mxu0 %v1108
        %v1313 = vpop.f32.mrb[0].mxu0
        %v1314 = vadd.f32 0.0, %v1313
        %v1315 = vpop.f32.mrb[0].mxu0
        %1316 = vmatprep.mubr.f32.mxu0 0.0
        %1317 = vmatmul.mubr.f32.gmra.mrb[0].mxu0 %v1111
        %v1318 = vpop.f32.mrb[0].mxu0
        %v1319 = vadd.f32 0.0, %v1318
        %v1320 = vpop.f32.mrb[0].mxu0
        %1321 = vmatprep.mubr.f32.mxu0 0.0
        %1322 = vmatmul.mubr.f32.gmra.mrb[0].mxu0 %v1114
        %v1323 = vpop.f32.mrb[0].mxu0
        %v1324 = vadd.f32 0.0, %v1323
        %v1325 = vpop.f32.mrb[0].mxu0
        %1326 = vmatprep.mubr.f32.mxu0 0.0
        %1327 = vmatmul.mubr.f32.gmra.mrb[0].mxu0 %v1117
        %v1328 = vpop.f32.mrb[0].mxu0
        %v1329 = vadd.f32 0.0, %v1328
        %v1330 = vpop.f32.mrb[0].mxu0
        %1331 = vmatprep.mubr.f32.mxu0 0.0
        %1332 = vmatmul.mubr.f32.gmra.mrb[0].mxu0 %v1120
        %v1333 = vpop.f32.mrb[0].mxu0
        %v1334 = vadd.f32 0.0, %v1333
        %v1335 = vpop.f32.mrb[0].mxu0
        %1336 = vmatprep.mubr.f32.mxu0 0.0
        %1337 = vmatmul.mubr.f32.gmra.mrb[0].mxu0 %v1123
        %v1338 = vpop.f32.mrb[0].mxu0
        %v1339 = vadd.f32 0.0, %v1338
        %v1340 = vpop.f32.mrb[0].mxu0
        %1341 = vmatprep.mubr.f32.mxu0 0.0
        %1342 = vmatmul.mubr.f32.gmra.mrb[0].mxu0 %v1126
        %v1343 = vpop.f32.mrb[0].mxu0
        %v1344 = vadd.f32 0.0, %v1343
        %v1345 = vpop.f32.mrb[0].mxu0
        %1346 = vmatprep.mubr.f32.mxu0 0.0
        %1347 = vmatmul.mubr.f32.gmra.mrb[0].mxu0 %v1129
        %v1348 = vpop.f32.mrb[0].mxu0
        %v1349 = vadd.f32 0.0, %v1348
        %v1350 = vpop.f32.mrb[0].mxu0
        %1351 = vmatprep.mubr.f32.mxu0 0.0
        %1352 = vmatmul.mubr.f32.gmra.mrb[0].mxu0 %v1132
        %v1353 = vpop.f32.mrb[0].mxu0
        %v1354 = vadd.f32 0.0, %v1353
        %v1355 = vpop.f32.mrb[0].mxu0
        %1356 = vmatprep.mubr.f32.mxu0 0.0
        %1357 = vmatmul.mubr.f32.gmra.mrb[0].mxu0 %v1135
        %v1358 = vpop.f32.mrb[0].mxu0
        %v1359 = vadd.f32 0.0, %v1358
        %v1360 = vpop.f32.mrb[0].mxu0
        %1361 = vdwg.mxu0
        %v1362 = vsel %vm830, %v1204, 0.0
        %v1363 = vsel %vm831, %v1209, 0.0
        %v1364 = vsel %vm832, %v1214, 0.0
        %v1365 = vsel %vm833, %v1219, 0.0
        %v1366 = vsel %vm834, %v1224, 0.0
        %v1367 = vsel %vm835, %v1229, 0.0
        %v1368 = vsel %vm836, %v1234, 0.0
        %v1369 = vsel %vm837, %v1239, 0.0
        %v1370 = vsel %vm838, %v1244, 0.0
        %v1371 = vsel %vm839, %v1249, 0.0
        %v1372 = vsel %vm840, %v1254, 0.0
        %v1373 = vsel %vm841, %v1259, 0.0
        %v1374 = vsel %vm842, %v1264, 0.0
        %v1375 = vsel %vm843, %v1269, 0.0
        %v1376 = vsel %vm844, %v1274, 0.0
        %v1377 = vsel %vm845, %v1279, 0.0
        %v1378 = vsel %vm846, %v1284, 0.0
        %v1379 = vsel %vm847, %v1289, 0.0
        %v1380 = vsel %vm848, %v1294, 0.0
        %v1381 = vsel %vm849, %v1299, 0.0
        %v1382 = vsel %vm850, %v1304, 0.0
        %v1383 = vsel %vm851, %v1309, 0.0
        %v1384 = vsel %vm852, %v1314, 0.0
        %v1385 = vsel %vm853, %v1319, 0.0
        %v1386 = vsel %vm854, %v1324, 0.0
        %v1387 = vsel %vm855, %v1329, 0.0
        %v1388 = vsel %vm856, %v1334, 0.0
        %v1389 = vsel %vm857, %v1339, 0.0
        %v1390 = vsel %vm858, %v1344, 0.0
        %v1391 = vsel %vm859, %v1349, 0.0
        %v1392 = vsel %vm860, %v1354, 0.0
        %v1393 = vsel %vm861, %v1359, 0.0
        %1394 = vst.msk [vmem:[%s333] sm:$0xff] %vm476, %v1362
        %1395 = vst.msk [vmem:[%s333 + $0x8] sm:$0xff] %vm476, %v1363
        %1396 = vst.msk [vmem:[%s333 + $0x10] sm:$0xff] %vm476, %v1364
        %1397 = vst.msk [vmem:[%s333 + $0x18] sm:$0xff] %vm476, %v1365
        %1398 = vst.msk [vmem:[%s333 + $0x20] sm:$0xff] %vm476, %v1366
        %1399 = vst.msk [vmem:[%s333 + $0x28] sm:$0xff] %vm476, %v1367
        %1400 = vst.msk [vmem:[%s333 + $0x30] sm:$0xff] %vm476, %v1368
        %1401 = vst.msk [vmem:[%s333 + $0x38] sm:$0xff] %vm476, %v1369
        %1402 = vst.msk [vmem:[%s333 + $0x40] sm:$0xff] %vm476, %v1370
        %1403 = vst.msk [vmem:[%s333 + $0x48] sm:$0xff] %vm476, %v1371
        %1404 = vst.msk [vmem:[%s333 + $0x50] sm:$0xff] %vm476, %v1372
        %1405 = vst.msk [vmem:[%s333 + $0x58] sm:$0xff] %vm476, %v1373
        %1406 = vst.msk [vmem:[%s333 + $0x60] sm:$0xff] %vm476, %v1374
        %1407 = vst.msk [vmem:[%s333 + $0x68] sm:$0xff] %vm476, %v1375
        %1408 = vst.msk [vmem:[%s333 + $0x70] sm:$0xff] %vm476, %v1376
        %1409 = vst.msk [vmem:[%s333 + $0x78] sm:$0xff] %vm476, %v1377
        %1410 = vst.msk [vmem:[%s333 + $0x80] sm:$0xff] %vm476, %v1378
        %1411 = vst.msk [vmem:[%s333 + $0x88] sm:$0xff] %vm476, %v1379
        %1412 = vst.msk [vmem:[%s333 + $0x90] sm:$0xff] %vm476, %v1380
        %1413 = vst.msk [vmem:[%s333 + $0x98] sm:$0xff] %vm476, %v1381
        %1414 = vst.msk [vmem:[%s333 + $0xa0] sm:$0xff] %vm476, %v1382
        %1415 = vst.msk [vmem:[%s333 + $0xa8] sm:$0xff] %vm476, %v1383
        %1416 = vst.msk [vmem:[%s333 + $0xb0] sm:$0xff] %vm476, %v1384
        %1417 = vst.msk [vmem:[%s333 + $0xb8] sm:$0xff] %vm476, %v1385
        %1418 = vst.msk [vmem:[%s333 + $0xc0] sm:$0xff] %vm476, %v1386
        %1419 = vst.msk [vmem:[%s333 + $0xc8] sm:$0xff] %vm476, %v1387
        %1420 = vst.msk [vmem:[%s333 + $0xd0] sm:$0xff] %vm476, %v1388
        %1421 = vst.msk [vmem:[%s333 + $0xd8] sm:$0xff] %vm476, %v1389
        %1422 = vst.msk [vmem:[%s333 + $0xe0] sm:$0xff] %vm476, %v1390
        %1423 = vst.msk [vmem:[%s333 + $0xe8] sm:$0xff] %vm476, %v1391
        %1424 = vst.msk [vmem:[%s333 + $0xf0] sm:$0xff] %vm476, %v1392
        %1425 = vst.msk [vmem:[%s333 + $0xf8] sm:$0xff] %vm476, %v1393
        %v1426 = vsel %vm476, %v1362, 0.0
        %v1427 = vsel %vm476, %v1363, 0.0
        %v1428 = vadd.f32 %v1426, %v1427
        %v1429 = vsel %vm476, %v1364, 0.0
        %v1430 = vadd.f32 %v1428, %v1429
        %v1431 = vsel %vm476, %v1365, 0.0
        %v1432 = vadd.f32 %v1430, %v1431
        %v1433 = vsel %vm476, %v1366, 0.0
        %v1434 = vadd.f32 %v1432, %v1433
        %v1435 = vsel %vm476, %v1367, 0.0
        %v1436 = vadd.f32 %v1434, %v1435
        %v1437 = vsel %vm476, %v1368, 0.0
        %v1438 = vadd.f32 %v1436, %v1437
        %v1439 = vsel %vm476, %v1369, 0.0
        %v1440 = vadd.f32 %v1438, %v1439
        %v1441 = vsel %vm476, %v1370, 0.0
        %v1442 = vadd.f32 %v1440, %v1441
        %v1443 = vsel %vm476, %v1371, 0.0
        %v1444 = vadd.f32 %v1442, %v1443
        %v1445 = vsel %vm476, %v1372, 0.0
        %v1446 = vadd.f32 %v1444, %v1445
        %v1447 = vsel %vm476, %v1373, 0.0
        %v1448 = vadd.f32 %v1446, %v1447
        %v1449 = vsel %vm476, %v1374, 0.0
        %v1450 = vadd.f32 %v1448, %v1449
        %v1451 = vsel %vm476, %v1375, 0.0
        %v1452 = vadd.f32 %v1450, %v1451
        %v1453 = vsel %vm476, %v1376, 0.0
        %v1454 = vadd.f32 %v1452, %v1453
        %v1455 = vsel %vm476, %v1377, 0.0
        %v1456 = vadd.f32 %v1454, %v1455
        %v1457 = vsel %vm476, %v1378, 0.0
        %v1458 = vadd.f32 %v1456, %v1457
        %v1459 = vsel %vm476, %v1379, 0.0
        %v1460 = vadd.f32 %v1458, %v1459
        %v1461 = vsel %vm476, %v1380, 0.0
        %v1462 = vadd.f32 %v1460, %v1461
        %v1463 = vsel %vm476, %v1381, 0.0
        %v1464 = vadd.f32 %v1462, %v1463
        %v1465 = vsel %vm476, %v1382, 0.0
        %v1466 = vadd.f32 %v1464, %v1465
        %v1467 = vsel %vm476, %v1383, 0.0
        %v1468 = vadd.f32 %v1466, %v1467
        %v1469 = vsel %vm476, %v1384, 0.0
        %v1470 = vadd.f32 %v1468, %v1469
        %v1471 = vsel %vm476, %v1385, 0.0
        %v1472 = vadd.f32 %v1470, %v1471
        %v1473 = vsel %vm476, %v1386, 0.0
        %v1474 = vadd.f32 %v1472, %v1473
        %v1475 = vsel %vm476, %v1387, 0.0
        %v1476 = vadd.f32 %v1474, %v1475
        %v1477 = vsel %vm476, %v1388, 0.0
        %v1478 = vadd.f32 %v1476, %v1477
        %v1479 = vsel %vm476, %v1389, 0.0
        %v1480 = vadd.f32 %v1478, %v1479
        %v1481 = vsel %vm476, %v1390, 0.0
        %v1482 = vadd.f32 %v1480, %v1481
        %v1483 = vsel %vm476, %v1391, 0.0
        %v1484 = vadd.f32 %v1482, %v1483
        %v1485 = vsel %vm476, %v1392, 0.0
        %v1486 = vadd.f32 %v1484, %v1485
        %v1487 = vsel %vm476, %v1393, 0.0
        %v1488 = vadd.f32 %v1486, %v1487
        %v1489 = vrot.slane %v1488, 4
        %v1490 = vadd.f32 %v1488, %v1489
        %v1491 = vrot.slane %v1490, 2
        %v1492 = vadd.f32 %v1490, %v1491
        %v1493 = vrot.slane %v1492, 1
        %v1494 = vadd.f32 %v1492, %v1493
        %vm1495 = vcmask 253952
        %1496 = vst.msk [vmem:[%s316] sm:$0x1] %vm1495, %v1494
        %v1497 = vmul.f32 %v1362, %v1362
        %v1498 = vmul.f32 %v1363, %v1363
        %v1499 = vmul.f32 %v1364, %v1364
        %v1500 = vmul.f32 %v1365, %v1365
        %v1501 = vmul.f32 %v1366, %v1366
        %v1502 = vmul.f32 %v1367, %v1367
        %v1503 = vmul.f32 %v1368, %v1368
        %v1504 = vmul.f32 %v1369, %v1369
        %v1505 = vmul.f32 %v1370, %v1370
        %v1506 = vmul.f32 %v1371, %v1371
        %v1507 = vmul.f32 %v1372, %v1372
        %v1508 = vmul.f32 %v1373, %v1373
        %v1509 = vmul.f32 %v1374, %v1374
        %v1510 = vmul.f32 %v1375, %v1375
        %v1511 = vmul.f32 %v1376, %v1376
        %v1512 = vmul.f32 %v1377, %v1377
        %v1513 = vmul.f32 %v1378, %v1378
        %v1514 = vmul.f32 %v1379, %v1379
        %v1515 = vmul.f32 %v1380, %v1380
        %v1516 = vmul.f32 %v1381, %v1381
        %v1517 = vmul.f32 %v1382, %v1382
        %v1518 = vmul.f32 %v1383, %v1383
        %v1519 = vmul.f32 %v1384, %v1384
        %v1520 = vmul.f32 %v1385, %v1385
        %v1521 = vmul.f32 %v1386, %v1386
        %v1522 = vmul.f32 %v1387, %v1387
        %v1523 = vmul.f32 %v1388, %v1388
        %v1524 = vmul.f32 %v1389, %v1389
        %v1525 = vmul.f32 %v1390, %v1390
        %v1526 = vmul.f32 %v1391, %v1391
        %v1527 = vmul.f32 %v1392, %v1392
        %v1528 = vmul.f32 %v1393, %v1393
        %v1529 = vsel %vm476, %v1497, 0.0
        %v1530 = vsel %vm476, %v1498, 0.0
        %v1531 = vadd.f32 %v1529, %v1530
        %v1532 = vsel %vm476, %v1499, 0.0
        %v1533 = vadd.f32 %v1531, %v1532
        %v1534 = vsel %vm476, %v1500, 0.0
        %v1535 = vadd.f32 %v1533, %v1534
        %v1536 = vsel %vm476, %v1501, 0.0
        %v1537 = vadd.f32 %v1535, %v1536
        %v1538 = vsel %vm476, %v1502, 0.0
        %v1539 = vadd.f32 %v1537, %v1538
        %v1540 = vsel %vm476, %v1503, 0.0
        %v1541 = vadd.f32 %v1539, %v1540
        %v1542 = vsel %vm476, %v1504, 0.0
        %v1543 = vadd.f32 %v1541, %v1542
        %v1544 = vsel %vm476, %v1505, 0.0
        %v1545 = vadd.f32 %v1543, %v1544
        %v1546 = vsel %vm476, %v1506, 0.0
        %v1547 = vadd.f32 %v1545, %v1546
        %v1548 = vsel %vm476, %v1507, 0.0
        %v1549 = vadd.f32 %v1547, %v1548
        %v1550 = vsel %vm476, %v1508, 0.0
        %v1551 = vadd.f32 %v1549, %v1550
        %v1552 = vsel %vm476, %v1509, 0.0
        %v1553 = vadd.f32 %v1551, %v1552
        %v1554 = vsel %vm476, %v1510, 0.0
        %v1555 = vadd.f32 %v1553, %v1554
        %v1556 = vsel %vm476, %v1511, 0.0
        %v1557 = vadd.f32 %v1555, %v1556
        %v1558 = vsel %vm476, %v1512, 0.0
        %v1559 = vadd.f32 %v1557, %v1558
        %v1560 = vsel %vm476, %v1513, 0.0
        %v1561 = vadd.f32 %v1559, %v1560
        %v1562 = vsel %vm476, %v1514, 0.0
        %v1563 = vadd.f32 %v1561, %v1562
        %v1564 = vsel %vm476, %v1515, 0.0
        %v1565 = vadd.f32 %v1563, %v1564
        %v1566 = vsel %vm476, %v1516, 0.0
        %v1567 = vadd.f32 %v1565, %v1566
        %v1568 = vsel %vm476, %v1517, 0.0
        %v1569 = vadd.f32 %v1567, %v1568
        %v1570 = vsel %vm476, %v1518, 0.0
        %v1571 = vadd.f32 %v1569, %v1570
        %v1572 = vsel %vm476, %v1519, 0.0
        %v1573 = vadd.f32 %v1571, %v1572
        %v1574 = vsel %vm476, %v1520, 0.0
        %v1575 = vadd.f32 %v1573, %v1574
        %v1576 = vsel %vm476, %v1521, 0.0
        %v1577 = vadd.f32 %v1575, %v1576
        %v1578 = vsel %vm476, %v1522, 0.0
        %v1579 = vadd.f32 %v1577, %v1578
        %v1580 = vsel %vm476, %v1523, 0.0
        %v1581 = vadd.f32 %v1579, %v1580
        %v1582 = vsel %vm476, %v1524, 0.0
        %v1583 = vadd.f32 %v1581, %v1582
        %v1584 = vsel %vm476, %v1525, 0.0
        %v1585 = vadd.f32 %v1583, %v1584
        %v1586 = vsel %vm476, %v1526, 0.0
        %v1587 = vadd.f32 %v1585, %v1586
        %v1588 = vsel %vm476, %v1527, 0.0
        %v1589 = vadd.f32 %v1587, %v1588
        %v1590 = vsel %vm476, %v1528, 0.0
        %v1591 = vadd.f32 %v1589, %v1590
        %v1592 = vrot.slane %v1591, 4
        %v1593 = vadd.f32 %v1591, %v1592
        %v1594 = vrot.slane %v1593, 2
        %v1595 = vadd.f32 %v1593, %v1594
        %v1596 = vrot.slane %v1595, 1
        %v1597 = vadd.f32 %v1595, %v1596
        %1598 = vst.msk [vmem:[%s322] sm:$0x1] %vm1495, %v1597
        %s1599 = smul.u32 32, %s26
        %p1600 = scmp.lt.s32.totalorder %s1599, 63
        %s1601 = scalar_select %p1600, %s1599, 63
        %s1602 = smul.addr %s1601, 8
        %s1603 = scalar_lea.vmem %s5, %s1602
        %s1604 = smul.u32 32, %s26
        %p1605 = scmp.lt.s32.totalorder %s1604, 63
        %s1606 = scalar_select %p1605, %s1604, 63
        %s1607 = smul.addr %s1606, 8
        %s1608 = scalar_lea.vmem %s6, %s1607
        %s1609 = sand.u32 %s196, 1
        %s1610 = scalar_lea.sflag [#allocation3], %s1609
        %s1611 = sand.u32 %s196, 1
        %s1612 = scalar_lea.vmem [#allocation2], %s1611
        %s1613 = sand.u32 %s222, 1
        %s1614 = scalar_lea.sflag [#allocation5], %s1613
        %s1615 = sand.u32 %s222, 1
        %s1616 = scalar_lea.vmem [#allocation4], %s1615
        // Predicated region
        $region41: #{tpu_custom_call.1} parent=39 // pred_check
          %p1617 = pneg %p154
        $region42: #{tpu_custom_call.1} parent=39 // pred_check_branch
          %1619 = sbr.rel (%p1617) target = $region44
        $region43: #{tpu_custom_call.1} parent=39 // pred_region
          %s1620 = smul.u32 32, %s26
        $region44: #{tpu_custom_call.1} parent=39 // pred_fallthru
          _
        // Predicated region
        $region45: #{tpu_custom_call.1} parent=39 // pred_check
          %p1621 = pneg %p180
        $region46: #{tpu_custom_call.1} parent=39 // pred_check_branch
          %1623 = sbr.rel (%p1621) target = $region48
        $region47: #{tpu_custom_call.1} parent=39 // pred_region
          %s1624 = smul.u32 32, %s26
        $region48: #{tpu_custom_call.1} parent=39 // pred_fallthru
          _
        // Predicated region
        $region49: #{tpu_custom_call.1} parent=39 // pred_check
          %p1625 = pneg %p206
        $region50: #{tpu_custom_call.1} parent=39 // pred_check_branch
          %1627 = sbr.rel (%p1625) target = $region52
        $region51: #{tpu_custom_call.1} parent=39 // pred_region
          %s1629 = ssub.s32 16, 16
          %1630 = vsyncadd %s1610, %s1629
          %s1631 = smul.addr %s26, 16
          %s1632 = scalar_lea.hbm %s7, %s1631
          %s1634 = sshll.u32 %s1612, 4
          %s1635 = int_to_ptr.vmem [resolvable:$true] %s1634
          %1637 = dma.vmem_to_hbm [thread:$0]  %s1635, 16, %s1632, %s1610
        $region52: #{tpu_custom_call.1} parent=39 // pred_fallthru
          _
        // Predicated region
        $region53: #{tpu_custom_call.1} parent=39 // pred_check
          %p1638 = pneg %p232
        $region54: #{tpu_custom_call.1} parent=39 // pred_check_branch
          %1640 = sbr.rel (%p1638) target = $region56
        $region55: #{tpu_custom_call.1} parent=39 // pred_region
          %s1642 = ssub.s32 16, 16
          %1643 = vsyncadd %s1614, %s1642
          %s1644 = smul.addr %s26, 16
          %s1645 = scalar_lea.hbm %s8, %s1644
          %s1647 = sshll.u32 %s1616, 4
          %s1648 = int_to_ptr.vmem [resolvable:$true] %s1647
          %1650 = dma.vmem_to_hbm [thread:$0]  %s1648, 16, %s1645, %s1614
        $region56: #{tpu_custom_call.1} parent=39 // pred_fallthru
          _
      $region40: #{tpu_custom_call.1} parent=5 // pred_fallthru
        _
      %p1651 = scmp.le.s32.totalorder 2, %s21
      // Predicated region
      $region57: #{tpu_custom_call.1} parent=5 // pred_check
        %p1652 = pneg %p1651
      $region58: #{tpu_custom_call.1} parent=5 // pred_check_branch
        %1654 = sbr.rel (%p1652) target = $region60
      $region59: #{tpu_custom_call.1} parent=5 // pred_region
        %s1655 = ssub.s32 %s21, 2
        // Predicated region
        $region61: #{tpu_custom_call.1} parent=59 // pred_check
          %p1656 = pneg %p160
        $region62: #{tpu_custom_call.1} parent=59 // pred_check_branch
          %1658 = sbr.rel (%p1656) target = $region64
        $region63: #{tpu_custom_call.1} parent=59 // pred_region
          %s1659 = smul.u32 32, %s27
          %p1660 = scmp.lt.s32.totalorder %s1659, 63
          %s1661 = scalar_select %p1660, %s1659, 63
          %s1662 = smul.addr %s1661, 8
          %s1663 = scalar_lea.vmem %s5, %s1662
        $region64: #{tpu_custom_call.1} parent=59 // pred_fallthru
          _
        // Predicated region
        $region65: #{tpu_custom_call.1} parent=59 // pred_check
          %p1664 = pneg %p186
        $region66: #{tpu_custom_call.1} parent=59 // pred_check_branch
          %1666 = sbr.rel (%p1664) target = $region68
        $region67: #{tpu_custom_call.1} parent=59 // pred_region
          %s1667 = smul.u32 32, %s27
          %p1668 = scmp.lt.s32.totalorder %s1667, 63
          %s1669 = scalar_select %p1668, %s1667, 63
          %s1670 = smul.addr %s1669, 8
          %s1671 = scalar_lea.vmem %s6, %s1670
        $region68: #{tpu_custom_call.1} parent=59 // pred_fallthru
          _
        // Predicated region
        $region69: #{tpu_custom_call.1} parent=59 // pred_check
          %p1672 = pneg %p212
        $region70: #{tpu_custom_call.1} parent=59 // pred_check_branch
          %1674 = sbr.rel (%p1672) target = $region72
        $region71: #{tpu_custom_call.1} parent=59 // pred_region
          %s1675 = sand.u32 %s197, 1
          %s1676 = scalar_lea.sflag [#allocation3], %s1675
          %s1677 = sand.u32 %s197, 1
          %s1678 = scalar_lea.vmem [#allocation2], %s1677
          %1679 = dma.done %s1676, 16
        $region72: #{tpu_custom_call.1} parent=59 // pred_fallthru
          _
        // Predicated region
        $region73: #{tpu_custom_call.1} parent=59 // pred_check
          %p1680 = pneg %p238
        $region74: #{tpu_custom_call.1} parent=59 // pred_check_branch
          %1682 = sbr.rel (%p1680) target = $region76
        $region75: #{tpu_custom_call.1} parent=59 // pred_region
          %s1683 = sand.u32 %s223, 1
          %s1684 = scalar_lea.sflag [#allocation5], %s1683
          %s1685 = sand.u32 %s223, 1
          %s1686 = scalar_lea.vmem [#allocation4], %s1685
          %1687 = dma.done %s1684, 16
        $region76: #{tpu_custom_call.1} parent=59 // pred_fallthru
          _
      $region60: #{tpu_custom_call.1} parent=5 // pred_fallthru
        _
    $region6: #{tpu_custom_call.1} parent=1 // loop_footer
      %s25 = sadd.s32 1, %s21
    $region7: #{tpu_custom_call.1} parent=1 // loop_footer_branch
      %20 = sbr.rel target = $region3
    $region8: #{tpu_custom_call.1} parent=1 // loop_exit
      _
    %1688 = vsyncpa [#allocation3], 1
    %s1689 = scalar_lea.sflag [#allocation3], 1
    %1690 = vsyncpa %s1689, 1
    %1691 = vsyncpa [#allocation5], 1
    %s1692 = scalar_lea.sflag [#allocation5], 1
    %1693 = vsyncpa %s1692, 1

</llo_original>
